<compile_context>
chip_gen: v5e
topology: v5e:2x2
jax: 0.10.0
libtpu: 0.0.40
codegen_flags: <defaults>
</compile_context>

<pallas_src>
import functools

import jax
import jax.numpy as jnp
import numpy as np
from jax.experimental import pallas as pl
from jax.experimental.pallas import tpu as pltpu

_EPS = 1e-5
_LANE = 128


# ---------------------------------------------------------------------------
# small helpers
# ---------------------------------------------------------------------------
def _round_up(x, m):
    return ((x + m - 1) // m) * m


def _pad_channels(a, cp):
    """Zero-pad the last (channel) axis of `a` to cp."""
    pad = cp - a.shape[-1]
    if pad == 0:
        return a
    return jnp.pad(a, [(0, 0)] * (a.ndim - 1) + [(0, pad)])


def _vmem_plan():
    """Generation-aware (per-tile VMEM budget, vmem_limit_bytes).
    128 MiB parts (v5e/v6e) -> 32 MiB budget / 96 MiB limit; 64 MiB (v7x) -> 16 / 48."""
    cap = None
    try:
        cap = getattr(pltpu.get_tpu_info(), "vmem_capacity_bytes", None)
    except Exception:
        cap = None
    if not cap:
        cap = 64 * 1024 * 1024          # conservative default: v7x per-TC VMEM
    cap = int(cap)
    return cap // 4, (cap * 3) // 4


def _pick_tile_n(n, h, w, ho, wo, cinp, cp, budget_bytes):
    """Largest batch tile whose dominant per-tile VMEM footprint fits the budget.
    Counts double-buffered pipeline blocks (x2) plus in-kernel temporaries."""
    a_pass = (2 * (h + 2) * (w + 2) * cinp * 2            # xpad in (bf16, x2 buffers)
              + 2 * 2 * ho * wo * cp * 2                  # y1 (+proj) out (bf16, x2)
              + ho * wo * 9 * cinp * 2                    # bf16 im2col patch matrix
              + 2 * ho * wo * cp * 4)                     # f32 GEMM accumulators
    b_pass = (2 * 2 * ho * wo * cp * 2                    # y1 in + y2 out (bf16, x2)
              + (ho + 2) * (wo + 2) * cp * 2              # bf16 padded scratch
              + ho * wo * cp * 4                          # BN1+ReLU f32 temp
              + ho * wo * (9 * cp * 2 + cp * 4))          # worst-case patch + f32 chunk
    per_img = max(a_pass, b_pass)
    tn = max(1, min(n, budget_bytes // max(per_img, 1)))
    # Keep at least 2 grid steps: required for megacore sharding on v7x and gives the
    # BlockSpec pipeline something to overlap on every generation.
    tn = min(tn, max(1, n // 2))
    while n % tn:
        tn -= 1
    return tn


def _pick_row_chunk(tn, ho, wo, cp, patch_budget=2 * 1024 * 1024):
    """Output-row chunk for the conv2 im2col GEMM: bounds the live bf16 patch matrix
    (and its f32 result) while keeping K = 9*Cp MXU depth per chunk."""
    per_row = tn * wo * (9 * cp * 2 + cp * 4)
    rc = max(1, min(ho, patch_budget // max(per_row, 1)))
    rc = min(rc, max(1, ho // 2))       # >= 2 chunks also bounds VMEM for small tiles
    while ho % rc:
        rc -= 1
    return rc


def _bn_scale_shift(stats, count, gamma, beta, cp):
    """Reduce per-tile (sum, sum^2) stats (t, 2, cp) -> fused BN (scale, shift) (2, cp).
    Training-mode BatchNorm: biased variance over (N, H, W)."""
    s = jnp.sum(stats[:, 0, :], axis=0)                  # (cp,)
    q = jnp.sum(stats[:, 1, :], axis=0)                  # (cp,)
    mean = s / count
    var = jnp.maximum(q / count - mean * mean, 0.0)
    inv = jax.lax.rsqrt(var + _EPS)
    g = _pad_channels(gamma.reshape(1, -1), cp).reshape(-1)
    b = _pad_channels(beta.reshape(1, -1), cp).reshape(-1)
    scale = g * inv
    shift = b - mean * scale
    return jnp.stack([scale, shift], axis=0).astype(jnp.float32)     # (2, cp)


# ---------------------------------------------------------------------------
# pass A: conv1 (3x3, stride) + optional 1x1 projection conv, bf16 outputs + f32 stats
# ---------------------------------------------------------------------------
def _conv1_kernel(*refs, stride, out_hw, use_proj):
    if use_proj:
        (xpad_ref, w1_ref, ws_ref, y1_ref, sc_ref, st1_ref, sts_ref) = refs
    else:
        (xpad_ref, w1_ref, y1_ref, st1_ref) = refs

    ho, wo = out_hw
    tn = xpad_ref.shape[0]
    cinp = xpad_ref.shape[-1]
    cp = y1_ref.shape[-1]
    m = tn * ho * wo

    xpad = xpad_ref[...]                                  # (tn, H+2, W+2, cinp) bf16
    taps = [xpad[:, dy:dy + (ho - 1) * stride + 1:stride,
                    dx:dx + (wo - 1) * stride + 1:stride, :].reshape(m, cinp)
            for dy in range(3) for dx in range(3)]
    patches = jnp.concatenate(taps, axis=-1)              # (m, 9*cinp) lane-aligned
    w1 = w1_ref[...].reshape(9 * cinp, cp)
    y1 = jnp.dot(patches, w1, preferred_element_type=jnp.float32)    # (m, cp) f32

    # BN statistics from the f32 accumulator, then downcast the activation to bf16.
    st1_ref[...] = jnp.stack(
        [jnp.sum(y1, axis=0), jnp.sum(y1 * y1, axis=0)], axis=0).reshape(1, 2, cp)
    y1_ref[...] = y1.reshape(tn, ho, wo, cp).astype(y1_ref.dtype)

    if use_proj:
        xs = xpad[:, 1:(ho - 1) * stride + 2:stride,
                     1:(wo - 1) * stride + 2:stride, :]   # un-padded strided centers
        sc = jnp.dot(xs.reshape(m, cinp), ws_ref[...],
                     preferred_element_type=jnp.float32)  # (m, cp) f32
        sts_ref[...] = jnp.stack(
            [jnp.sum(sc, axis=0), jnp.sum(sc * sc, axis=0)], axis=0).reshape(1, 2, cp)
        sc_ref[...] = sc.reshape(tn, ho, wo, cp).astype(sc_ref.dtype)


# ---------------------------------------------------------------------------
# pass B: BN1 + ReLU + conv2 (3x3, stride 1), row-chunked im2col GEMM, bf16 out + stats
# ---------------------------------------------------------------------------
def _conv2_kernel(y1_ref, bn1_ref, w2_ref, y2_ref, st2_ref, ypad_ref,
                  *, out_hw, row_chunk):
    ho, wo = out_hw
    tn = y1_ref.shape[0]
    cp = y1_ref.shape[-1]

    scale1 = bn1_ref[0:1, :]                              # (1, cp) f32
    shift1 = bn1_ref[1:2, :]
    y1n = jnp.maximum(y1_ref[...].astype(jnp.float32) * scale1 + shift1, 0.0)

    # Spatial pad=1 for conv2: bf16 scratch; zero only the 1-wide halo, then write the
    # interior once.  The halo is re-zeroed each step on purpose: under a "parallel"
    # grid axis the steps may be split across TensorCores (v7x) and program_id==0 would
    # not initialize the second core's scratch.
    ypad_ref[:, 0:1, :, :] = jnp.zeros((tn, 1, wo + 2, cp), ypad_ref.dtype)
    ypad_ref[:, ho + 1:ho + 2, :, :] = jnp.zeros((tn, 1, wo + 2, cp), ypad_ref.dtype)
    ypad_ref[:, :, 0:1, :] = jnp.zeros((tn, ho + 2, 1, cp), ypad_ref.dtype)
    ypad_ref[:, :, wo + 1:wo + 2, :] = jnp.zeros((tn, ho + 2, 1, cp), ypad_ref.dtype)
    ypad_ref[:, 1:ho + 1, 1:wo + 1, :] = y1n.astype(ypad_ref.dtype)

    w2 = w2_ref[...].reshape(9 * cp, cp)                  # bf16, lane-aligned K
    s_acc = jnp.zeros((cp,), jnp.float32)
    q_acc = jnp.zeros((cp,), jnp.float32)

    # Row-chunked im2col GEMM: bounds the live bf16 patch matrix while keeping
    # K = 9*cp per chunk (chunk count is static; r0 offsets are static slices).
    for r0 in range(0, ho, row_chunk):
        mc = tn * row_chunk * wo
        taps = [ypad_ref[:, r0 + dy:r0 + dy + row_chunk, dx:dx + wo, :].reshape(mc, cp)
                for dy in range(3) for dx in range(3)]
        patches = jnp.concatenate(taps, axis=-1)          # (mc, 9*cp) bf16
        y2 = jnp.dot(patches, w2, preferred_element_type=jnp.float32)
        # stats from the f32 accumulator, activation stored bf16
        s_acc = s_acc + jnp.sum(y2, axis=0)
        q_acc = q_acc + jnp.sum(y2 * y2, axis=0)
        y2_ref[:, r0:r0 + row_chunk, :, :] = (
            y2.reshape(tn, row_chunk, wo, cp).astype(y2_ref.dtype))

    st2_ref[...] = jnp.stack([s_acc, q_acc], axis=0).reshape(1, 2, cp)


# ---------------------------------------------------------------------------
# pass C: BN2 + ReLU + shortcut (BN or identity) + residual add, width-cout output
# ---------------------------------------------------------------------------
def _finalize_kernel(*refs, use_proj, cout):
    if use_proj:
        y2_ref, sc_ref, bn2_ref, bns_ref, out_ref = refs
    else:
        y2_ref, x_ref, bn2_ref, out_ref = refs

    scale2 = bn2_ref[0:1, :]
    shift2 = bn2_ref[1:2, :]
    y2n = jnp.maximum(y2_ref[...].astype(jnp.float32) * scale2 + shift2, 0.0)
    y2n = y2n[..., :cout]
    if use_proj:
        scn = (sc_ref[...].astype(jnp.float32) * bns_ref[0:1, :]
               + bns_ref[1:2, :])[..., :cout]
    else:
        scn = x_ref[...].astype(jnp.float32)              # identity shortcut: raw x
    out_ref[...] = (y2n + scn).astype(out_ref.dtype)


# ---------------------------------------------------------------------------
# wrapper: layout conversion, weight packing, tiling, and the three pallas_calls
# ---------------------------------------------------------------------------
def resblock_forward(x_nchw, params, *, stride=1, tile_n=None):
    """ResBlack forward. x_nchw: (N, Cin, H, W) f32 -> (N, Cout, Ho, Wo) f32."""
    n, cin, h, w = x_nchw.shape
    cout = params["w1"].shape[-1]
    ho = (h + 2 - 3) // stride + 1
    wo = (w + 2 - 3) // stride + 1
    use_proj = cin != cout
    cp = _round_up(cout, _LANE)                  # lane-dense output-channel width
    cinp = _round_up(cin, _LANE)                 # lane-dense input-channel width

    budget, vmem_limit = _vmem_plan()
    if tile_n is None:
        tile_n = _pick_tile_n(n, h, w, ho, wo, cinp, cp, budget)
    if n % tile_n:
        raise ValueError("tile_n must divide the batch size")
    t = n // tile_n
    count = float(n * ho * wo)

    x_nhwc = jnp.transpose(x_nchw, (0, 2, 3, 1)).astype(jnp.float32)
    # conv1 input feeds the MXU only -> bf16; channels padded to a lane multiple so the
    # im2col concat is lane-aligned and a single K=9*cinp GEMM is used.
    xpad = jnp.pad(x_nhwc, ((0, 0), (1, 1), (1, 1), (0, cinp - cin))
                   ).astype(jnp.bfloat16)

    # weights: zero-pad channels to lane widths, cast to bf16 (accumulation stays f32).
    w1p = (jnp.zeros((3, 3, cinp, cp), jnp.float32)
           .at[:, :, :cin, :cout].set(params["w1"]).astype(jnp.bfloat16))
    w2p = (jnp.zeros((3, 3, cp, cp), jnp.float32)
           .at[:, :, :cout, :cout].set(params["w2"]).astype(jnp.bfloat16))

    cparams = pltpu.CompilerParams(
        dimension_semantics=("parallel",),       # batch tiles are independent
        vmem_limit_bytes=int(vmem_limit),        # generation-aware explicit budget
    )

    act_shape = jax.ShapeDtypeStruct((n, ho, wo, cp), jnp.bfloat16)
    act_spec = pl.BlockSpec((tile_n, ho, wo, cp), lambda i: (i, 0, 0, 0))
    st_shape = jax.ShapeDtypeStruct((t, 2, cp), jnp.float32)
    st_spec = pl.BlockSpec((1, 2, cp), lambda i: (i, 0, 0))
    bn_spec = pl.BlockSpec((2, cp), lambda i: (0, 0))

    # ---------------- pass A ------------------------------------------------
    a_inputs = [xpad, w1p]
    a_in_specs = [pl.BlockSpec((tile_n, h + 2, w + 2, cinp), lambda i: (i, 0, 0, 0)),
                  pl.BlockSpec((3, 3, cinp, cp), lambda i: (0, 0, 0, 0))]
    if use_proj:
        wsp = (jnp.zeros((cinp, cp), jnp.float32)
               .at[:cin, :cout].set(params["ws"]).astype(jnp.bfloat16))
        a_inputs.append(wsp)
        a_in_specs.append(pl.BlockSpec((cinp, cp), lambda i: (0, 0)))
        a_out_shape = [act_shape, act_shape, st_shape, st_shape]
        a_out_specs = [act_spec, act_spec, st_spec, st_spec]
    else:
        a_out_shape = [act_shape, st_shape]
        a_out_specs = [act_spec, st_spec]

    a_out = pl.pallas_call(
        functools.partial(_conv1_kernel, stride=stride, out_hw=(ho, wo),
                          use_proj=use_proj),
        grid=(t,),
        in_specs=a_in_specs,
        out_specs=a_out_specs,
        out_shape=a_out_shape,
        compiler_params=cparams,
    )(*a_inputs)

    if use_proj:
        y1raw, scraw, st1, sts = a_out
    else:
        y1raw, st1 = a_out

    bn1 = _bn_scale_shift(st1, count, params["g1"], params["be1"], cp)

    # ---------------- pass B ------------------------------------------------
    row_chunk = _pick_row_chunk(tile_n, ho, wo, cp)
    y2raw, st2 = pl.pallas_call(
        functools.partial(_conv2_kernel, out_hw=(ho, wo), row_chunk=row_chunk),
        grid=(t,),
        in_specs=[act_spec, bn_spec,
                  pl.BlockSpec((3, 3, cp, cp), lambda i: (0, 0, 0, 0))],
        out_specs=[act_spec, st_spec],
        out_shape=[act_shape, st_shape],
        scratch_shapes=[pltpu.VMEM((tile_n, ho + 2, wo + 2, cp), jnp.bfloat16)],
        compiler_params=cparams,
    )(y1raw, bn1, w2p)

    bn2 = _bn_scale_shift(st2, count, params["g2"], params["be2"], cp)

    # ---------------- pass C ------------------------------------------------
    out_shape_c = jax.ShapeDtypeStruct((n, ho, wo, cout), jnp.float32)
    out_spec_c = pl.BlockSpec((tile_n, ho, wo, cout), lambda i: (i, 0, 0, 0))

    if use_proj:
        bns = _bn_scale_shift(sts, count, params["gs"], params["bes"], cp)
        c_inputs = [y2raw, scraw, bn2, bns]
        c_in_specs = [act_spec, act_spec, bn_spec, bn_spec]
    else:
        # identity shortcut: raw (strided) NHWC x goes straight into pass C — no
        # channel padding, no dummy scale/shift, no extra HBM round-trip.
        x_sc = x_nhwc[:, ::stride, ::stride, :]
        c_inputs = [y2raw, x_sc, bn2]
        c_in_specs = [act_spec,
                      pl.BlockSpec((tile_n, ho, wo, cout), lambda i: (i, 0, 0, 0)),
                      bn_spec]

    out_nhwc = pl.pallas_call(
        functools.partial(_finalize_kernel, use_proj=use_proj, cout=cout),
        grid=(t,),
        in_specs=c_in_specs,
        out_specs=out_spec_c,
        out_shape=out_shape_c,
        compiler_params=cparams,
    )(*c_inputs)

    # Pass C already dropped padded channels; one XLA transpose restores NCHW.
    return jnp.transpose(out_nhwc, (0, 3, 1, 2))


# ---------------------------------------------------------------------------
# deterministic parameter init (shapes dictated by ResBlack.__init__)
# ---------------------------------------------------------------------------
def init_params(key, cin, cout):
    ks = jax.random.split(key, 6)

    def conv_w(k, kh, kw, ci, co):
        bound = 1.0 / np.sqrt(ci * kh * kw)
        return jax.random.uniform(k, (kh, kw, ci, co), jnp.float32, -bound, bound)

    p = {
        "w1": conv_w(ks[0], 3, 3, cin, cout),
        "b1": jax.random.uniform(ks[1], (1, cout), jnp.float32, -0.1, 0.1),
        "g1": jnp.ones((1, cout), jnp.float32),
        "be1": jnp.zeros((1, cout), jnp.float32),
        "w2": conv_w(ks[2], 3, 3, cout, cout),
        "b2": jax.random.uniform(ks[3], (1, cout), jnp.float32, -0.1, 0.1),
        "g2": jnp.ones((1, cout), jnp.float32),
        "be2": jnp.zeros((1, cout), jnp.float32),
    }
    if cin != cout:  # projection shortcut: 1x1 conv (bias=False) + BN
        b = 1.0 / np.sqrt(cin)
        p["ws"] = jax.random.uniform(ks[4], (cin, cout), jnp.float32, -b, b)
        p["gs"] = jnp.ones((1, cout), jnp.float32)
        p["bes"] = jnp.zeros((1, cout), jnp.float32)
    return p


# ---------------------------------------------------------------------------
# pure-JAX reference (for correctness check only; includes the conv biases)
# ---------------------------------------------------------------------------
def resblock_reference(x_nchw, params, *, stride=1):
    x = jnp.transpose(x_nchw, (0, 2, 3, 1)).astype(jnp.float32)

    def conv(inp, wgt, s, pad):
        return jax.lax.conv_general_dilated(
            inp, wgt, window_strides=(s, s), padding=[(pad, pad), (pad, pad)],
            dimension_numbers=("NHWC", "HWIO", "NHWC"))

    def bn(y, g, b):
        mean = jnp.mean(y, axis=(0, 1, 2), keepdims=True)
        var = jnp.mean(jnp.square(y - mean), axis=(0, 1, 2), keepdims=True)
        return (y - mean) * jax.lax.rsqrt(var + _EPS) * g + b

    y = jax.nn.relu(bn(conv(x, params["w1"], stride, 1) + params["b1"],
                       params["g1"], params["be1"]))
    y = jax.nn.relu(bn(conv(y, params["w2"], 1, 1) + params["b2"],
                       params["g2"], params["be2"]))
    cin, cout = x.shape[-1], params["w1"].shape[-1]
    if cin != cout:
        ws4 = params["ws"].reshape(1, 1, cin, cout)
        sc = bn(conv(x, ws4, stride, 0), params["gs"], params["bes"])
    else:
        sc = x[:, ::stride, ::stride, :]
    return jnp.transpose(y + sc, (0, 3, 1, 2))


if __name__ == "__main__":
    key = jax.random.PRNGKey(0)
    kx1, kp1, kx2, kp2 = jax.random.split(key, 4)

    # Case 1: projection shortcut (in != out), stride 1, explicit batch tiling
    # (tile_n=1 -> grid of 2, exercising the cross-tile BN partial-stat reduction).
    N, CIN, COUT, H, W = 2, 4, 8, 16, 16
    x1 = jax.random.normal(kx1, (N, CIN, H, W), jnp.float32)
    p1 = init_params(kp1, CIN, COUT)
    out1 = resblock_forward(x1, p1, stride=1, tile_n=1)
    jax.block_until_ready(out1)
    ref1 = resblock_reference(x1, p1, stride=1)
    assert out1.shape == (N, COUT, H, W)
    # bf16 MXU operands + bf16 inter-pass activations vs pure-f32 reference.
    np.testing.assert_allclose(np.asarray(out1), np.asarray(ref1),
                               atol=8e-2, rtol=8e-2)

    # Case 2: identity shortcut (in == out), auto-chosen batch tile (>= 2 grid steps).
    x2 = jax.random.normal(kx2, (N, COUT, H, W), jnp.float32)
    p2 = init_params(kp2, COUT, COUT)
    out2 = resblock_forward(x2, p2, stride=1)
    jax.block_until_ready(out2)
    ref2 = resblock_reference(x2, p2, stride=1)
    assert out2.shape == (N, COUT, H, W)
    np.testing.assert_allclose(np.asarray(out2), np.asarray(ref2),
                               atol=8e-2, rtol=8e-2)

    print("KERNEL_OK")
</pallas_src>

<mosaic_0001>
module attributes {stable_mosaic.version = 11 : i64} {
  func.func @_conv1_kernel(%arg0: i32, %arg1: memref<1x18x18x128xbf16, #tpu.memory_space<vmem>>, %arg2: memref<3x3x128x128xbf16, #tpu.memory_space<vmem>>, %arg3: memref<128x128xbf16, #tpu.memory_space<vmem>>, %arg4: memref<1x16x16x128xbf16, #tpu.memory_space<vmem>>, %arg5: memref<1x16x16x128xbf16, #tpu.memory_space<vmem>>, %arg6: memref<1x2x128xf32, #tpu.memory_space<vmem>>, %arg7: memref<1x2x128xf32, #tpu.memory_space<vmem>>) attributes {dimension_semantics = [#tpu.dimension_semantics<parallel>], iteration_bounds = array<i64: 2>, scalar_prefetch = 0 : i64, scratch_operands = 0 : i64, tpu.core_type = #tpu.core_type<tc>, window_params = [{transform_indices = @transform_0, window_bounds = array<i64: 1, 18, 18, 128>}, {pipeline_mode = #tpu.pipeline_mode<synchronous>, transform_indices = @transform_1, window_bounds = array<i64: 3, 3, 128, 128>}, {pipeline_mode = #tpu.pipeline_mode<synchronous>, transform_indices = @transform_2, window_bounds = array<i64: 128, 128>}, {transform_indices = @transform_3, window_bounds = array<i64: 1, 16, 16, 128>}, {transform_indices = @transform_4, window_bounds = array<i64: 1, 16, 16, 128>}, {transform_indices = @transform_5, window_bounds = array<i64: 1, 2, 128>}, {transform_indices = @transform_6, window_bounds = array<i64: 1, 2, 128>}]} {
    %c0 = arith.constant 0 : index
    %c0_0 = arith.constant 0 : index
    %c0_1 = arith.constant 0 : index
    %c0_2 = arith.constant 0 : index
    %0 = vector.load %arg1[%c0, %c0_0, %c0_1, %c0_2] : memref<1x18x18x128xbf16, #tpu.memory_space<vmem>>, vector<1x18x18x128xbf16>
    %1 = vector.extract_strided_slice %0 {offsets = [0, 0, 0, 0], sizes = [1, 16, 16, 128], strides = [1, 1, 1, 1]} : vector<1x18x18x128xbf16> to vector<1x16x16x128xbf16>
    %2 = vector.shape_cast %1 : vector<1x16x16x128xbf16> to vector<256x128xbf16>
    %3 = vector.extract_strided_slice %0 {offsets = [0, 0, 1, 0], sizes = [1, 16, 16, 128], strides = [1, 1, 1, 1]} : vector<1x18x18x128xbf16> to vector<1x16x16x128xbf16>
    %4 = vector.shape_cast %3 : vector<1x16x16x128xbf16> to vector<256x128xbf16>
    %5 = vector.extract_strided_slice %0 {offsets = [0, 0, 2, 0], sizes = [1, 16, 16, 128], strides = [1, 1, 1, 1]} : vector<1x18x18x128xbf16> to vector<1x16x16x128xbf16>
    %6 = vector.shape_cast %5 : vector<1x16x16x128xbf16> to vector<256x128xbf16>
    %7 = vector.extract_strided_slice %0 {offsets = [0, 1, 0, 0], sizes = [1, 16, 16, 128], strides = [1, 1, 1, 1]} : vector<1x18x18x128xbf16> to vector<1x16x16x128xbf16>
    %8 = vector.shape_cast %7 : vector<1x16x16x128xbf16> to vector<256x128xbf16>
    %9 = vector.extract_strided_slice %0 {offsets = [0, 1, 1, 0], sizes = [1, 16, 16, 128], strides = [1, 1, 1, 1]} : vector<1x18x18x128xbf16> to vector<1x16x16x128xbf16>
    %10 = vector.shape_cast %9 : vector<1x16x16x128xbf16> to vector<256x128xbf16>
    %11 = vector.extract_strided_slice %0 {offsets = [0, 1, 2, 0], sizes = [1, 16, 16, 128], strides = [1, 1, 1, 1]} : vector<1x18x18x128xbf16> to vector<1x16x16x128xbf16>
    %12 = vector.shape_cast %11 : vector<1x16x16x128xbf16> to vector<256x128xbf16>
    %13 = vector.extract_strided_slice %0 {offsets = [0, 2, 0, 0], sizes = [1, 16, 16, 128], strides = [1, 1, 1, 1]} : vector<1x18x18x128xbf16> to vector<1x16x16x128xbf16>
    %14 = vector.shape_cast %13 : vector<1x16x16x128xbf16> to vector<256x128xbf16>
    %15 = vector.extract_strided_slice %0 {offsets = [0, 2, 1, 0], sizes = [1, 16, 16, 128], strides = [1, 1, 1, 1]} : vector<1x18x18x128xbf16> to vector<1x16x16x128xbf16>
    %16 = vector.shape_cast %15 : vector<1x16x16x128xbf16> to vector<256x128xbf16>
    %17 = vector.extract_strided_slice %0 {offsets = [0, 2, 2, 0], sizes = [1, 16, 16, 128], strides = [1, 1, 1, 1]} : vector<1x18x18x128xbf16> to vector<1x16x16x128xbf16>
    %18 = vector.shape_cast %17 : vector<1x16x16x128xbf16> to vector<256x128xbf16>
    %19 = tpu.concatenate %2, %4, %6, %8, %10, %12, %14, %16, %18 in 1 : vector<256x128xbf16>, vector<256x128xbf16>, vector<256x128xbf16>, vector<256x128xbf16>, vector<256x128xbf16>, vector<256x128xbf16>, vector<256x128xbf16>, vector<256x128xbf16>, vector<256x128xbf16> -> vector<256x1152xbf16>
    %c0_3 = arith.constant 0 : index
    %c0_4 = arith.constant 0 : index
    %c0_5 = arith.constant 0 : index
    %c0_6 = arith.constant 0 : index
    %20 = vector.load %arg2[%c0_3, %c0_4, %c0_5, %c0_6] : memref<3x3x128x128xbf16, #tpu.memory_space<vmem>>, vector<3x3x128x128xbf16>
    %21 = vector.shape_cast %20 : vector<3x3x128x128xbf16> to vector<1152x128xbf16>
    %cst = arith.constant dense<0.000000e+00> : vector<256x128xf32>
    %22 = tpu.matmul %19, %21, %cst {dimension_numbers = #tpu.dot_dimension_numbers<[1], [0], [0], [1], [0, 0, 1, 1], [], []>} : vector<256x1152xbf16>, vector<1152x128xbf16>, vector<256x128xf32> -> vector<256x128xf32>
    %cst_7 = arith.constant dense<0.000000e+00> : vector<128xf32>
    %23 = vector.multi_reduction <add>, %22, %cst_7 [0] : vector<256x128xf32> to vector<128xf32>
    %24 = arith.mulf %22, %22 : vector<256x128xf32>
    %cst_8 = arith.constant dense<0.000000e+00> : vector<128xf32>
    %25 = vector.multi_reduction <add>, %24, %cst_8 [0] : vector<256x128xf32> to vector<128xf32>
    %26 = vector.shape_cast %23 : vector<128xf32> to vector<1x128xf32>
    %27 = vector.shape_cast %25 : vector<128xf32> to vector<1x128xf32>
    %28 = tpu.concatenate %26, %27 in 0 : vector<1x128xf32>, vector<1x128xf32> -> vector<2x128xf32>
    %29 = vector.shape_cast %28 : vector<2x128xf32> to vector<1x2x128xf32>
    %c0_9 = arith.constant 0 : index
    %c0_10 = arith.constant 0 : index
    %c0_11 = arith.constant 0 : index
    %30 = vector.load %arg6[%c0_9, %c0_10, %c0_11] : memref<1x2x128xf32, #tpu.memory_space<vmem>>, vector<1x2x128xf32>
    tpu.vector_store %arg6[%c0_9, %c0_10, %c0_11], %29 {strides = array<i32>} : memref<1x2x128xf32, #tpu.memory_space<vmem>>, vector<1x2x128xf32>,
    %31 = vector.shape_cast %22 : vector<256x128xf32> to vector<1x16x16x128xf32>
    %32 = arith.truncf %31 : vector<1x16x16x128xf32> to vector<1x16x16x128xbf16>
    %c0_12 = arith.constant 0 : index
    %c0_13 = arith.constant 0 : index
    %c0_14 = arith.constant 0 : index
    %c0_15 = arith.constant 0 : index
    %33 = vector.load %arg4[%c0_12, %c0_13, %c0_14, %c0_15] : memref<1x16x16x128xbf16, #tpu.memory_space<vmem>>, vector<1x16x16x128xbf16>
    tpu.vector_store %arg4[%c0_12, %c0_13, %c0_14, %c0_15], %32 {strides = array<i32>} : memref<1x16x16x128xbf16, #tpu.memory_space<vmem>>, vector<1x16x16x128xbf16>,
    %34 = vector.extract_strided_slice %0 {offsets = [0, 1, 1, 0], sizes = [1, 16, 16, 128], strides = [1, 1, 1, 1]} : vector<1x18x18x128xbf16> to vector<1x16x16x128xbf16>
    %35 = vector.shape_cast %34 : vector<1x16x16x128xbf16> to vector<256x128xbf16>
    %c0_16 = arith.constant 0 : index
    %c0_17 = arith.constant 0 : index
    %36 = vector.load %arg3[%c0_16, %c0_17] : memref<128x128xbf16, #tpu.memory_space<vmem>>, vector<128x128xbf16>
    %cst_18 = arith.constant dense<0.000000e+00> : vector<256x128xf32>
    %37 = tpu.matmul %35, %36, %cst_18 {dimension_numbers = #tpu.dot_dimension_numbers<[1], [0], [0], [1], [0, 0, 1, 1], [], []>} : vector<256x128xbf16>, vector<128x128xbf16>, vector<256x128xf32> -> vector<256x128xf32>
    %cst_19 = arith.constant dense<0.000000e+00> : vector<128xf32>
    %38 = vector.multi_reduction <add>, %37, %cst_19 [0] : vector<256x128xf32> to vector<128xf32>
    %39 = arith.mulf %37, %37 : vector<256x128xf32>
    %cst_20 = arith.constant dense<0.000000e+00> : vector<128xf32>
    %40 = vector.multi_reduction <add>, %39, %cst_20 [0] : vector<256x128xf32> to vector<128xf32>
    %41 = vector.shape_cast %38 : vector<128xf32> to vector<1x128xf32>
    %42 = vector.shape_cast %40 : vector<128xf32> to vector<1x128xf32>
    %43 = tpu.concatenate %41, %42 in 0 : vector<1x128xf32>, vector<1x128xf32> -> vector<2x128xf32>
    %44 = vector.shape_cast %43 : vector<2x128xf32> to vector<1x2x128xf32>
    %c0_21 = arith.constant 0 : index
    %c0_22 = arith.constant 0 : index
    %c0_23 = arith.constant 0 : index
    %45 = vector.load %arg7[%c0_21, %c0_22, %c0_23] : memref<1x2x128xf32, #tpu.memory_space<vmem>>, vector<1x2x128xf32>
    tpu.vector_store %arg7[%c0_21, %c0_22, %c0_23], %44 {strides = array<i32>} : memref<1x2x128xf32, #tpu.memory_space<vmem>>, vector<1x2x128xf32>,
    %46 = vector.shape_cast %37 : vector<256x128xf32> to vector<1x16x16x128xf32>
    %47 = arith.truncf %46 : vector<1x16x16x128xf32> to vector<1x16x16x128xbf16>
    %c0_24 = arith.constant 0 : index
    %c0_25 = arith.constant 0 : index
    %c0_26 = arith.constant 0 : index
    %c0_27 = arith.constant 0 : index
    %48 = vector.load %arg5[%c0_24, %c0_25, %c0_26, %c0_27] : memref<1x16x16x128xbf16, #tpu.memory_space<vmem>>, vector<1x16x16x128xbf16>
    tpu.vector_store %arg5[%c0_24, %c0_25, %c0_26, %c0_27], %47 {strides = array<i32>} : memref<1x16x16x128xbf16, #tpu.memory_space<vmem>>, vector<1x16x16x128xbf16>,
    return
  }
  func.func @transform_0(%arg0: i32) -> (i32, i32, i32, i32) {
    %c0_i32 = arith.constant 0 : i32
    %c0_i32_0 = arith.constant 0 : i32
    %c0_i32_1 = arith.constant 0 : i32
    %c0_i32_2 = arith.constant 0 : i32
    return %arg0, %c0_i32, %c0_i32_0, %c0_i32_1 : i32, i32, i32, i32
  }
  func.func @transform_1(%arg0: i32) -> (i32, i32, i32, i32) {
    %c0_i32 = arith.constant 0 : i32
    %c0_i32_0 = arith.constant 0 : i32
    %c0_i32_1 = arith.constant 0 : i32
    %c0_i32_2 = arith.constant 0 : i32
    %c0_i32_3 = arith.constant 0 : i32
    return %c0_i32, %c0_i32_0, %c0_i32_1, %c0_i32_2 : i32, i32, i32, i32
  }
  func.func @transform_2(%arg0: i32) -> (i32, i32) {
    %c0_i32 = arith.constant 0 : i32
    %c0_i32_0 = arith.constant 0 : i32
    %c0_i32_1 = arith.constant 0 : i32
    return %c0_i32, %c0_i32_0 : i32, i32
  }
  func.func @transform_3(%arg0: i32) -> (i32, i32, i32, i32) {
    %c0_i32 = arith.constant 0 : i32
    %c0_i32_0 = arith.constant 0 : i32
    %c0_i32_1 = arith.constant 0 : i32
    %c0_i32_2 = arith.constant 0 : i32
    return %arg0, %c0_i32, %c0_i32_0, %c0_i32_1 : i32, i32, i32, i32
  }
  func.func @transform_4(%arg0: i32) -> (i32, i32, i32, i32) {
    %c0_i32 = arith.constant 0 : i32
    %c0_i32_0 = arith.constant 0 : i32
    %c0_i32_1 = arith.constant 0 : i32
    %c0_i32_2 = arith.constant 0 : i32
    return %arg0, %c0_i32, %c0_i32_0, %c0_i32_1 : i32, i32, i32, i32
  }
  func.func @transform_5(%arg0: i32) -> (i32, i32, i32) {
    %c0_i32 = arith.constant 0 : i32
    %c0_i32_0 = arith.constant 0 : i32
    %c0_i32_1 = arith.constant 0 : i32
    return %arg0, %c0_i32, %c0_i32_0 : i32, i32, i32
  }
  func.func @transform_6(%arg0: i32) -> (i32, i32, i32) {
    %c0_i32 = arith.constant 0 : i32
    %c0_i32_0 = arith.constant 0 : i32
    %c0_i32_1 = arith.constant 0 : i32
    return %arg0, %c0_i32, %c0_i32_0 : i32, i32, i32
  }
}

</mosaic_0001>

<llo_original>
// kernel: tpu_custom_call.1
$region0: #{tpu_custom_call.1}
  #allocation0 [shape = 'u32[]', space=smem, size = 0x4, offset = 0x4, fixed_abs, tag = 'smem constant byte address 0x4 - core index']
  #allocation1 [shape = 'u32[72,128]{1,0:T(1,128)}', space=vmem, size = 0x9000, scoped, tag = 'internal scratch']
  %s0 = inlined_call_operand.vmem [shape: bf16[2,18,18,128], index: 0, kind: input, shape index: {}]
  %s1 = inlined_call_operand.vmem [shape: bf16[3,3,128,128], index: 1, kind: input, shape index: {}]
  %s2 = inlined_call_operand.vmem [shape: bf16[128,128], index: 2, kind: input, shape index: {}]
  %s3 = inlined_call_operand.hbm [shape: bf16[2,16,16,128], index: 3, kind: output, shape index: {0}]
  %s4 = inlined_call_operand.hbm [shape: bf16[2,16,16,128], index: 4, kind: output, shape index: {1}]
  %s5 = inlined_call_operand.hbm [shape: f32[2,2,128], index: 5, kind: output, shape index: {2}]
  %s6 = inlined_call_operand.hbm [shape: f32[2,2,128], index: 6, kind: output, shape index: {3}]
  %7 = xla_tuple %s3, %s4, %s5, %s6
  %s8 = sld [smem:[#allocation0]]
  $region69: #{tpu_custom_call.1} parent=0
    _
  %s10 = ssub.s32 1, %s8
  %s11 = scalar_select 0, %s10, %s8
  $region1: #{tpu_custom_call.1} parent=0
    #allocation2 [shape = 'u8[131072]{0}', space=vmem, size = 0x20000, scoped, tag = 'output window, operand 0']
    #allocation3 [shape = 's32[2]{0}', space=sflag, size = 0x8, scoped, tag = 'scoped memory for tpu_custom_call.1']
    #allocation4 [shape = 'u8[131072]{0}', space=vmem, size = 0x20000, scoped, tag = 'output window, operand 1']
    #allocation5 [shape = 's32[2]{0}', space=sflag, size = 0x8, scoped, tag = 'scoped memory for tpu_custom_call.1']
    #allocation6 [shape = 'u8[2048]{0}', space=vmem, size = 0x800, scoped, tag = 'output window, operand 2']
    #allocation7 [shape = 'u8[2048]{0}', space=vmem, size = 0x800, scoped, tag = 'output window, operand 3']
    #allocation8 [shape = 's32[2]{0}', space=sflag, size = 0x8, scoped, tag = 'scoped memory for tpu_custom_call.1']
    %12 = vsyncpa [#allocation3], 0
    %s13 = scalar_lea.sflag [#allocation3], 1
    %14 = vsyncpa %s13, 0
    %15 = vsyncpa [#allocation5], 0
    %s16 = scalar_lea.sflag [#allocation5], 1
    %17 = vsyncpa %s16, 0
    %18 = vsyncpa [#allocation8], 0
    %s19 = scalar_lea.sflag [#allocation8], 1
    %20 = vsyncpa %s19, 0
    loop: start=0, step=1, limit=4
    $region2: #{tpu_custom_call.1} parent=1 // loop_pre_header
      _
    $region3: #{tpu_custom_call.1} parent=1 // loop_header
      %s22 = sphi 0, %s26
      %p23 = scmp.ge.s32.totalorder %s22, 4
      %s32 = sphi 0, %s34
      %s35 = sphi 0, %s32
      %s36 = sphi 0, %s35
      %s52 = sphi 0, %s36
      %s56 = sphi 0, %s56
      %s58 = sphi 0, %s56
      %s59 = sphi 0, %s58
      %s73 = sphi 0, %s59
      %s77 = sphi 0, %s77
      %s79 = sphi 0, %s77
      %s80 = sphi 0, %s79
      %s94 = sphi 0, %s80
      %s100 = sphi 0, %s102
      %s103 = sphi 0, %s100
      %s104 = sphi 0, %s103
      %s120 = sphi 0, %s104
      %s126 = sphi 0, %s128
      %s129 = sphi 0, %s126
      %s130 = sphi 0, %s129
      %s146 = sphi 0, %s130
      %s152 = sphi 0, %s154
      %s155 = sphi 0, %s152
      %s156 = sphi 0, %s155
      %s172 = sphi 0, %s156
      %s178 = sphi 0, %s180
      %s181 = sphi 0, %s178
      %s182 = sphi 0, %s181
      %s198 = sphi 0, %s182
    $region4: #{tpu_custom_call.1} parent=1 // loop_header_branch
      %25 = sbr.rel (%p23) target = $region8
    $region5: #{tpu_custom_call.1} parent=1 // loop_body
      %s27 = ssub.s32 %s22, 1
      %s28 = ssub.s32 %s22, 2
      %s29 = sadd.s32 %s22, 1
      %s30 = ssub.s32 %s22, %s29
      %p31 = scmp.eq.s32.totalorder %s30, 0
      %s33 = sadd.s32 %s32, 1
      %s34 = scalar_select %p31, %s32, %s33
      %p37 = pneg %p31
      %p38 = scmp.eq.s32.totalorder %s22, 1
      %p39 = por %p37, %p38
      %p40 = scmp.ne.s32.totalorder %s32, %s35
      %p41 = scmp.eq.s32.totalorder %s22, 0
      %p42 = por %p40, %p41
      %p43 = scmp.ne.s32.totalorder %s32, %s35
      %p44 = scmp.eq.s32.totalorder %s27, 1
      %p45 = por %p43, %p44
      %p46 = scmp.ne.s32.totalorder %s35, %s36
      %p47 = scmp.eq.s32.totalorder %s27, 0
      %p48 = por %p46, %p47
      %p49 = scmp.ne.s32.totalorder %s35, %s36
      %p50 = scmp.eq.s32.totalorder %s28, 1
      %p51 = por %p49, %p50
      %p53 = scmp.ne.s32.totalorder %s36, %s52
      %p54 = scmp.eq.s32.totalorder %s28, 0
      %p55 = por %p53, %p54
      %s57 = sadd.s32 %s56, 1
      %p60 = scmp.eq.s32.totalorder %s22, 1
      %p61 = scmp.ne.s32.totalorder %s56, %s58
      %p62 = scmp.eq.s32.totalorder %s22, 0
      %p63 = por %p61, %p62
      %p64 = scmp.ne.s32.totalorder %s56, %s58
      %p65 = scmp.eq.s32.totalorder %s27, 1
      %p66 = por %p64, %p65
      %p67 = scmp.ne.s32.totalorder %s58, %s59
      %p68 = scmp.eq.s32.totalorder %s27, 0
      %p69 = por %p67, %p68
      %p70 = scmp.ne.s32.totalorder %s58, %s59
      %p71 = scmp.eq.s32.totalorder %s28, 1
      %p72 = por %p70, %p71
      %p74 = scmp.ne.s32.totalorder %s59, %s73
      %p75 = scmp.eq.s32.totalorder %s28, 0
      %p76 = por %p74, %p75
      %s78 = sadd.s32 %s77, 1
      %p81 = scmp.eq.s32.totalorder %s22, 1
      %p82 = scmp.ne.s32.totalorder %s77, %s79
      %p83 = scmp.eq.s32.totalorder %s22, 0
      %p84 = por %p82, %p83
      %p85 = scmp.ne.s32.totalorder %s77, %s79
      %p86 = scmp.eq.s32.totalorder %s27, 1
      %p87 = por %p85, %p86
      %p88 = scmp.ne.s32.totalorder %s79, %s80
      %p89 = scmp.eq.s32.totalorder %s27, 0
      %p90 = por %p88, %p89
      %p91 = scmp.ne.s32.totalorder %s79, %s80
      %p92 = scmp.eq.s32.totalorder %s28, 1
      %p93 = por %p91, %p92
      %p95 = scmp.ne.s32.totalorder %s80, %s94
      %p96 = scmp.eq.s32.totalorder %s28, 0
      %p97 = por %p95, %p96
      %s98 = ssub.s32 %s22, %s29
      %p99 = scmp.eq.s32.totalorder %s98, 0
      %s101 = sadd.s32 %s100, 1
      %s102 = scalar_select %p99, %s100, %s101
      %p105 = pneg %p99
      %p106 = scmp.eq.s32.totalorder %s22, 1
      %p107 = por %p105, %p106
      %p108 = scmp.ne.s32.totalorder %s100, %s103
      %p109 = scmp.eq.s32.totalorder %s22, 0
      %p110 = por %p108, %p109
      %p111 = scmp.ne.s32.totalorder %s100, %s103
      %p112 = scmp.eq.s32.totalorder %s27, 1
      %p113 = por %p111, %p112
      %p114 = scmp.ne.s32.totalorder %s103, %s104
      %p115 = scmp.eq.s32.totalorder %s27, 0
      %p116 = por %p114, %p115
      %p117 = scmp.ne.s32.totalorder %s103, %s104
      %p118 = scmp.eq.s32.totalorder %s28, 1
      %p119 = por %p117, %p118
      %p121 = scmp.ne.s32.totalorder %s104, %s120
      %p122 = scmp.eq.s32.totalorder %s28, 0
      %p123 = por %p121, %p122
      %s124 = ssub.s32 %s22, %s29
      %p125 = scmp.eq.s32.totalorder %s124, 0
      %s127 = sadd.s32 %s126, 1
      %s128 = scalar_select %p125, %s126, %s127
      %p131 = pneg %p125
      %p132 = scmp.eq.s32.totalorder %s22, 1
      %p133 = por %p131, %p132
      %p134 = scmp.ne.s32.totalorder %s126, %s129
      %p135 = scmp.eq.s32.totalorder %s22, 0
      %p136 = por %p134, %p135
      %p137 = scmp.ne.s32.totalorder %s126, %s129
      %p138 = scmp.eq.s32.totalorder %s27, 1
      %p139 = por %p137, %p138
      %p140 = scmp.ne.s32.totalorder %s129, %s130
      %p141 = scmp.eq.s32.totalorder %s27, 0
      %p142 = por %p140, %p141
      %p143 = scmp.ne.s32.totalorder %s129, %s130
      %p144 = scmp.eq.s32.totalorder %s28, 1
      %p145 = por %p143, %p144
      %p147 = scmp.ne.s32.totalorder %s130, %s146
      %p148 = scmp.eq.s32.totalorder %s28, 0
      %p149 = por %p147, %p148
      %s150 = ssub.s32 %s22, %s29
      %p151 = scmp.eq.s32.totalorder %s150, 0
      %s153 = sadd.s32 %s152, 1
      %s154 = scalar_select %p151, %s152, %s153
      %p157 = pneg %p151
      %p158 = scmp.eq.s32.totalorder %s22, 1
      %p159 = por %p157, %p158
      %p160 = scmp.ne.s32.totalorder %s152, %s155
      %p161 = scmp.eq.s32.totalorder %s22, 0
      %p162 = por %p160, %p161
      %p163 = scmp.ne.s32.totalorder %s152, %s155
      %p164 = scmp.eq.s32.totalorder %s27, 1
      %p165 = por %p163, %p164
      %p166 = scmp.ne.s32.totalorder %s155, %s156
      %p167 = scmp.eq.s32.totalorder %s27, 0
      %p168 = por %p166, %p167
      %p169 = scmp.ne.s32.totalorder %s155, %s156
      %p170 = scmp.eq.s32.totalorder %s28, 1
      %p171 = por %p169, %p170
      %p173 = scmp.ne.s32.totalorder %s156, %s172
      %p174 = scmp.eq.s32.totalorder %s28, 0
      %p175 = por %p173, %p174
      %s176 = ssub.s32 %s22, %s29
      %p177 = scmp.eq.s32.totalorder %s176, 0
      %s179 = sadd.s32 %s178, 1
      %s180 = scalar_select %p177, %s178, %s179
      %p183 = pneg %p177
      %p184 = scmp.eq.s32.totalorder %s22, 1
      %p185 = por %p183, %p184
      %p186 = scmp.ne.s32.totalorder %s178, %s181
      %p187 = scmp.eq.s32.totalorder %s22, 0
      %p188 = por %p186, %p187
      %p189 = scmp.ne.s32.totalorder %s178, %s181
      %p190 = scmp.eq.s32.totalorder %s27, 1
      %p191 = por %p189, %p190
      %p192 = scmp.ne.s32.totalorder %s181, %s182
      %p193 = scmp.eq.s32.totalorder %s27, 0
      %p194 = por %p192, %p193
      %p195 = scmp.ne.s32.totalorder %s181, %s182
      %p196 = scmp.eq.s32.totalorder %s28, 1
      %p197 = por %p195, %p196
      %p199 = scmp.ne.s32.totalorder %s182, %s198
      %p200 = scmp.eq.s32.totalorder %s28, 0
      %p201 = por %p199, %p200
      %p202 = scmp.le.s32.totalorder 1, %s22
      %p203 = scmp.lt.s32.totalorder %s22, 3
      %p204 = pnand %p202, %p203
      %p205 = pneg %p204
      // Predicated region
      $region9: #{tpu_custom_call.1} parent=5 // pred_check
        _
      $region10: #{tpu_custom_call.1} parent=5 // pred_check_branch
        %207 = sbr.rel (%p204) target = $region12
      $region11: #{tpu_custom_call.1} parent=5 // pred_region
        %s208 = ssub.s32 %s22, 1
        // Predicated region
        $region13: #{tpu_custom_call.1} parent=11 // pred_check
          %p209 = pneg %p69
        $region14: #{tpu_custom_call.1} parent=11 // pred_check_branch
          %211 = sbr.rel (%p209) target = $region16
        $region15: #{tpu_custom_call.1} parent=11 // pred_region
          _
        $region16: #{tpu_custom_call.1} parent=11 // pred_fallthru
          _
        // Predicated region
        $region17: #{tpu_custom_call.1} parent=11 // pred_check
          %p212 = pneg %p90
        $region18: #{tpu_custom_call.1} parent=11 // pred_check_branch
          %214 = sbr.rel (%p212) target = $region20
        $region19: #{tpu_custom_call.1} parent=11 // pred_region
          _
        $region20: #{tpu_custom_call.1} parent=11 // pred_fallthru
          _
      $region12: #{tpu_custom_call.1} parent=5 // pred_fallthru
        _
      %p215 = scmp.lt.s32.totalorder %s22, 2
      // Predicated region
      $region21: #{tpu_custom_call.1} parent=5 // pred_check
        %p216 = pneg %p215
      $region22: #{tpu_custom_call.1} parent=5 // pred_check_branch
        %218 = sbr.rel (%p216) target = $region24
      $region23: #{tpu_custom_call.1} parent=5 // pred_region
        // Predicated region
        $region25: #{tpu_custom_call.1} parent=23 // pred_check
          %p219 = pneg %p42
        $region26: #{tpu_custom_call.1} parent=23 // pred_check_branch
          %221 = sbr.rel (%p219) target = $region28
        $region27: #{tpu_custom_call.1} parent=23 // pred_region
          %p222 = scmp.lt.s32.totalorder %s22, 1
          %s223 = scalar_select %p222, %s22, 1
          %s224 = smul.addr %s223, 54
          %s225 = smul.addr %s224, 4
          %s226 = scalar_lea.vmem %s0, %s225
        $region28: #{tpu_custom_call.1} parent=23 // pred_fallthru
          _
      $region24: #{tpu_custom_call.1} parent=5 // pred_fallthru
        _
      %p227 = scmp.le.s32.totalorder 1, %s22
      %p228 = scmp.lt.s32.totalorder %s22, 3
      %p229 = pnand %p227, %p228
      %p230 = pneg %p229
      // Predicated region
      $region29: #{tpu_custom_call.1} parent=5 // pred_check
        _
      $region30: #{tpu_custom_call.1} parent=5 // pred_check_branch
        %232 = sbr.rel (%p229) target = $region32
      $region31: #{tpu_custom_call.1} parent=5 // pred_region
        %s233 = ssub.s32 %s22, 1
        %p234 = scmp.lt.s32.totalorder %s27, 1
        %s235 = scalar_select %p234, %s27, 1
        %s236 = smul.addr %s235, 54
        %s237 = smul.addr %s236, 4
        %s238 = scalar_lea.vmem %s0, %s237
        %p239 = pneg %p48
        %p240 = pneg %p45
        %p241 = pneg %p69
        %p242 = pneg %p66
        %p243 = pneg %p90
        %p244 = pneg %p87
        %p245 = pneg %p116
        %p246 = pneg %p113
        %s247 = sand.u32 %s103, 1
        %s248 = scalar_lea.sflag [#allocation3], %s247
        %s249 = sand.u32 %s103, 1
        %s250 = smul.addr %s249, 128
        %s251 = scalar_lea.vmem [#allocation2], %s250
        %p252 = pneg %p142
        %p253 = pneg %p139
        %s254 = sand.u32 %s27, 1
        %s255 = scalar_lea.sflag [#allocation5], %s254
        %s256 = sand.u32 %s129, 1
        %s257 = smul.addr %s256, 128
        %s258 = scalar_lea.vmem [#allocation4], %s257
        %p259 = pneg %p168
        %p260 = pneg %p165
        %s261 = sand.u32 %s27, 1
        %s262 = scalar_lea.sflag [#allocation5], %s261
        %s263 = sand.u32 %s155, 1
        %s264 = smul.addr %s263, 2
        %s265 = scalar_lea.vmem [#allocation6], %s264
        %p266 = pneg %p194
        %p267 = pneg %p191
        %s268 = sand.u32 %s181, 1
        %s269 = scalar_lea.sflag [#allocation8], %s268
        %s270 = sand.u32 %s181, 1
        %s271 = smul.addr %s270, 2
        %s272 = scalar_lea.vmem [#allocation7], %s271
        %p273 = scmp.lt.s32.totalorder %s27, 1
        %s274 = scalar_select %p273, %s27, 1
        %s275 = smul.addr %s274, 54
        %s276 = smul.addr %s275, 4
        %s277 = scalar_lea.vmem %s0, %s276
        %v278 = vld [vmem:[%s277] sm:$0xf]
        %v279 = vld [vmem:[%s277 + $0x4] sm:$0xf]
        %v280 = vld [vmem:[%s277 + $0x8] sm:$0x1]
        %v281 = vld [vmem:[%s277 + $0xc] sm:$0xf]
        %v282 = vld [vmem:[%s277 + $0x10] sm:$0xf]
        %v283 = vld [vmem:[%s277 + $0x14] sm:$0x1]
        %v284 = vld [vmem:[%s277 + $0x18] sm:$0xf]
        %v285 = vld [vmem:[%s277 + $0x1c] sm:$0xf]
        %v286 = vld [vmem:[%s277 + $0x20] sm:$0x1]
        %v287 = vld [vmem:[%s277 + $0x24] sm:$0xf]
        %v288 = vld [vmem:[%s277 + $0x28] sm:$0xf]
        %v289 = vld [vmem:[%s277 + $0x2c] sm:$0x1]
        %v290 = vld [vmem:[%s277 + $0x30] sm:$0xf]
        %v291 = vld [vmem:[%s277 + $0x34] sm:$0xf]
        %v292 = vld [vmem:[%s277 + $0x38] sm:$0x1]
        %v293 = vld [vmem:[%s277 + $0x3c] sm:$0xf]
        %v294 = vld [vmem:[%s277 + $0x40] sm:$0xf]
        %v295 = vld [vmem:[%s277 + $0x44] sm:$0x1]
        %v296 = vld [vmem:[%s277 + $0x48] sm:$0xf]
        %v297 = vld [vmem:[%s277 + $0x4c] sm:$0xf]
        %v298 = vld [vmem:[%s277 + $0x50] sm:$0x1]
        %v299 = vld [vmem:[%s277 + $0x54] sm:$0xf]
        %v300 = vld [vmem:[%s277 + $0x58] sm:$0xf]
        %v301 = vld [vmem:[%s277 + $0x5c] sm:$0x1]
        %v302 = vld [vmem:[%s277 + $0x60] sm:$0xf]
        %v303 = vld [vmem:[%s277 + $0x64] sm:$0xf]
        %v304 = vld [vmem:[%s277 + $0x68] sm:$0x1]
        %v305 = vld [vmem:[%s277 + $0x6c] sm:$0xf]
        %v306 = vld [vmem:[%s277 + $0x70] sm:$0xf]
        %v307 = vld [vmem:[%s277 + $0x74] sm:$0x1]
        %v308 = vld [vmem:[%s277 + $0x78] sm:$0xf]
        %v309 = vld [vmem:[%s277 + $0x7c] sm:$0xf]
        %v310 = vld [vmem:[%s277 + $0x80] sm:$0x1]
        %v311 = vld [vmem:[%s277 + $0x84] sm:$0xf]
        %v312 = vld [vmem:[%s277 + $0x88] sm:$0xf]
        %v313 = vld [vmem:[%s277 + $0x8c] sm:$0x1]
        %v314 = vld [vmem:[%s277 + $0x90] sm:$0xf]
        %v315 = vld [vmem:[%s277 + $0x94] sm:$0xf]
        %v316 = vld [vmem:[%s277 + $0x98] sm:$0x1]
        %v317 = vld [vmem:[%s277 + $0x9c] sm:$0xf]
        %v318 = vld [vmem:[%s277 + $0xa0] sm:$0xf]
        %v319 = vld [vmem:[%s277 + $0xa4] sm:$0x1]
        %v320 = vld [vmem:[%s277 + $0xa8] sm:$0xf]
        %v321 = vld [vmem:[%s277 + $0xac] sm:$0xf]
        %v322 = vld [vmem:[%s277 + $0xb0] sm:$0x1]
        %v323 = vld [vmem:[%s277 + $0xb4] sm:$0xf]
        %v324 = vld [vmem:[%s277 + $0xb8] sm:$0xf]
        %v325 = vld [vmem:[%s277 + $0xbc] sm:$0x1]
        %v326 = vld [vmem:[%s277 + $0xc0] sm:$0xf]
        %v327 = vld [vmem:[%s277 + $0xc4] sm:$0xf]
        %v328 = vld [vmem:[%s277 + $0xc8] sm:$0x1]
        %v329 = vld [vmem:[%s277 + $0xcc] sm:$0xf]
        %v330 = vld [vmem:[%s277 + $0xd0] sm:$0xf]
        %v331 = vld [vmem:[%s277 + $0xd4] sm:$0x1]
        %vm332 = vsmask.f32 3328
        %vm333 = vsmask.f32 7440
        %vm334 = vmor %vm332, %vm333
        %v336 = vshrl.u32 %v278, 16
        %v338 = vrot.slane %v336, 4
        %v339 = vshll.u32 %v278, 16
        %v341 = vrot.slane %v339, 5
        %v342 = vor.u32 %v338, %v341
        %v343 = vrot.slane %v342, 4
        %v345 = vshll.u32 %v279, 16
        %v347 = vrot.slane %v345, 5
        %v348 = vsel %vm334, %v343, %v347
        %v349 = vshrl.u32 %v279, 16
        %v351 = vrot.slane %v349, 4
        %v352 = vor.u32 %v351, %v347
        %v353 = vrot.slane %v352, 4
        %v355 = vshll.u32 %v280, 16
        %v357 = vrot.slane %v355, 5
        %v358 = vsel %vm334, %v353, %v357
        %v360 = vshrl.u32 %v281, 16
        %v362 = vrot.slane %v360, 4
        %v363 = vshll.u32 %v281, 16
        %v365 = vrot.slane %v363, 5
        %v366 = vor.u32 %v362, %v365
        %v367 = vrot.slane %v366, 4
        %v369 = vshll.u32 %v282, 16
        %v371 = vrot.slane %v369, 5
        %v372 = vsel %vm334, %v367, %v371
        %v373 = vshrl.u32 %v282, 16
        %v375 = vrot.slane %v373, 4
        %v376 = vor.u32 %v375, %v371
        %v377 = vrot.slane %v376, 4
        %v379 = vshll.u32 %v283, 16
        %v381 = vrot.slane %v379, 5
        %v382 = vsel %vm334, %v377, %v381
        %v384 = vshrl.u32 %v284, 16
        %v386 = vrot.slane %v384, 4
        %v387 = vshll.u32 %v284, 16
        %v389 = vrot.slane %v387, 5
        %v390 = vor.u32 %v386, %v389
        %v391 = vrot.slane %v390, 4
        %v393 = vshll.u32 %v285, 16
        %v395 = vrot.slane %v393, 5
        %v396 = vsel %vm334, %v391, %v395
        %v397 = vshrl.u32 %v285, 16
        %v399 = vrot.slane %v397, 4
        %v400 = vor.u32 %v399, %v395
        %v401 = vrot.slane %v400, 4
        %v403 = vshll.u32 %v286, 16
        %v405 = vrot.slane %v403, 5
        %v406 = vsel %vm334, %v401, %v405
        %v408 = vshrl.u32 %v287, 16
        %v410 = vrot.slane %v408, 4
        %v411 = vshll.u32 %v287, 16
        %v413 = vrot.slane %v411, 5
        %v414 = vor.u32 %v410, %v413
        %v415 = vrot.slane %v414, 4
        %v417 = vshll.u32 %v288, 16
        %v419 = vrot.slane %v417, 5
        %v420 = vsel %vm334, %v415, %v419
        %v421 = vshrl.u32 %v288, 16
        %v423 = vrot.slane %v421, 4
        %v424 = vor.u32 %v423, %v419
        %v425 = vrot.slane %v424, 4
        %v427 = vshll.u32 %v289, 16
        %v429 = vrot.slane %v427, 5
        %v430 = vsel %vm334, %v425, %v429
        %v432 = vshrl.u32 %v290, 16
        %v434 = vrot.slane %v432, 4
        %v435 = vshll.u32 %v290, 16
        %v437 = vrot.slane %v435, 5
        %v438 = vor.u32 %v434, %v437
        %v439 = vrot.slane %v438, 4
        %v441 = vshll.u32 %v291, 16
        %v443 = vrot.slane %v441, 5
        %v444 = vsel %vm334, %v439, %v443
        %v445 = vshrl.u32 %v291, 16
        %v447 = vrot.slane %v445, 4
        %v448 = vor.u32 %v447, %v443
        %v449 = vrot.slane %v448, 4
        %v451 = vshll.u32 %v292, 16
        %v453 = vrot.slane %v451, 5
        %v454 = vsel %vm334, %v449, %v453
        %v456 = vshrl.u32 %v293, 16
        %v458 = vrot.slane %v456, 4
        %v459 = vshll.u32 %v293, 16
        %v461 = vrot.slane %v459, 5
        %v462 = vor.u32 %v458, %v461
        %v463 = vrot.slane %v462, 4
        %v465 = vshll.u32 %v294, 16
        %v467 = vrot.slane %v465, 5
        %v468 = vsel %vm334, %v463, %v467
        %v469 = vshrl.u32 %v294, 16
        %v471 = vrot.slane %v469, 4
        %v472 = vor.u32 %v471, %v467
        %v473 = vrot.slane %v472, 4
        %v475 = vshll.u32 %v295, 16
        %v477 = vrot.slane %v475, 5
        %v478 = vsel %vm334, %v473, %v477
        %v480 = vshrl.u32 %v296, 16
        %v482 = vrot.slane %v480, 4
        %v483 = vshll.u32 %v296, 16
        %v485 = vrot.slane %v483, 5
        %v486 = vor.u32 %v482, %v485
        %v487 = vrot.slane %v486, 4
        %v489 = vshll.u32 %v297, 16
        %v491 = vrot.slane %v489, 5
        %v492 = vsel %vm334, %v487, %v491
        %v493 = vshrl.u32 %v297, 16
        %v495 = vrot.slane %v493, 4
        %v496 = vor.u32 %v495, %v491
        %v497 = vrot.slane %v496, 4
        %v499 = vshll.u32 %v298, 16
        %v501 = vrot.slane %v499, 5
        %v502 = vsel %vm334, %v497, %v501
        %v504 = vshrl.u32 %v299, 16
        %v506 = vrot.slane %v504, 4
        %v507 = vshll.u32 %v299, 16
        %v509 = vrot.slane %v507, 5
        %v510 = vor.u32 %v506, %v509
        %v511 = vrot.slane %v510, 4
        %v513 = vshll.u32 %v300, 16
        %v515 = vrot.slane %v513, 5
        %v516 = vsel %vm334, %v511, %v515
        %v517 = vshrl.u32 %v300, 16
        %v519 = vrot.slane %v517, 4
        %v520 = vor.u32 %v519, %v515
        %v521 = vrot.slane %v520, 4
        %v523 = vshll.u32 %v301, 16
        %v525 = vrot.slane %v523, 5
        %v526 = vsel %vm334, %v521, %v525
        %v528 = vshrl.u32 %v302, 16
        %v530 = vrot.slane %v528, 4
        %v531 = vshll.u32 %v302, 16
        %v533 = vrot.slane %v531, 5
        %v534 = vor.u32 %v530, %v533
        %v535 = vrot.slane %v534, 4
        %v537 = vshll.u32 %v303, 16
        %v539 = vrot.slane %v537, 5
        %v540 = vsel %vm334, %v535, %v539
        %v541 = vshrl.u32 %v303, 16
        %v543 = vrot.slane %v541, 4
        %v544 = vor.u32 %v543, %v539
        %v545 = vrot.slane %v544, 4
        %v547 = vshll.u32 %v304, 16
        %v549 = vrot.slane %v547, 5
        %v550 = vsel %vm334, %v545, %v549
        %v552 = vshrl.u32 %v305, 16
        %v554 = vrot.slane %v552, 4
        %v555 = vshll.u32 %v305, 16
        %v557 = vrot.slane %v555, 5
        %v558 = vor.u32 %v554, %v557
        %v559 = vrot.slane %v558, 4
        %v561 = vshll.u32 %v306, 16
        %v563 = vrot.slane %v561, 5
        %v564 = vsel %vm334, %v559, %v563
        %v565 = vshrl.u32 %v306, 16
        %v567 = vrot.slane %v565, 4
        %v568 = vor.u32 %v567, %v563
        %v569 = vrot.slane %v568, 4
        %v571 = vshll.u32 %v307, 16
        %v573 = vrot.slane %v571, 5
        %v574 = vsel %vm334, %v569, %v573
        %v576 = vshrl.u32 %v308, 16
        %v578 = vrot.slane %v576, 4
        %v579 = vshll.u32 %v308, 16
        %v581 = vrot.slane %v579, 5
        %v582 = vor.u32 %v578, %v581
        %v583 = vrot.slane %v582, 4
        %v585 = vshll.u32 %v309, 16
        %v587 = vrot.slane %v585, 5
        %v588 = vsel %vm334, %v583, %v587
        %v589 = vshrl.u32 %v309, 16
        %v591 = vrot.slane %v589, 4
        %v592 = vor.u32 %v591, %v587
        %v593 = vrot.slane %v592, 4
        %v595 = vshll.u32 %v310, 16
        %v597 = vrot.slane %v595, 5
        %v598 = vsel %vm334, %v593, %v597
        %v600 = vshrl.u32 %v311, 16
        %v602 = vrot.slane %v600, 4
        %v603 = vshll.u32 %v311, 16
        %v605 = vrot.slane %v603, 5
        %v606 = vor.u32 %v602, %v605
        %v607 = vrot.slane %v606, 4
        %v609 = vshll.u32 %v312, 16
        %v611 = vrot.slane %v609, 5
        %v612 = vsel %vm334, %v607, %v611
        %v613 = vshrl.u32 %v312, 16
        %v615 = vrot.slane %v613, 4
        %v616 = vor.u32 %v615, %v611
        %v617 = vrot.slane %v616, 4
        %v619 = vshll.u32 %v313, 16
        %v621 = vrot.slane %v619, 5
        %v622 = vsel %vm334, %v617, %v621
        %v624 = vshrl.u32 %v314, 16
        %v626 = vrot.slane %v624, 4
        %v627 = vshll.u32 %v314, 16
        %v629 = vrot.slane %v627, 5
        %v630 = vor.u32 %v626, %v629
        %v631 = vrot.slane %v630, 4
        %v633 = vshll.u32 %v315, 16
        %v635 = vrot.slane %v633, 5
        %v636 = vsel %vm334, %v631, %v635
        %v637 = vshrl.u32 %v315, 16
        %v639 = vrot.slane %v637, 4
        %v640 = vor.u32 %v639, %v635
        %v641 = vrot.slane %v640, 4
        %v643 = vshll.u32 %v316, 16
        %v645 = vrot.slane %v643, 5
        %v646 = vsel %vm334, %v641, %v645
        %v648 = vshrl.u32 %v317, 16
        %v650 = vrot.slane %v648, 4
        %v651 = vshll.u32 %v317, 16
        %v653 = vrot.slane %v651, 5
        %v654 = vor.u32 %v650, %v653
        %v655 = vrot.slane %v654, 4
        %v657 = vshll.u32 %v318, 16
        %v659 = vrot.slane %v657, 5
        %v660 = vsel %vm334, %v655, %v659
        %v661 = vshrl.u32 %v318, 16
        %v663 = vrot.slane %v661, 4
        %v664 = vor.u32 %v663, %v659
        %v665 = vrot.slane %v664, 4
        %v667 = vshll.u32 %v319, 16
        %v669 = vrot.slane %v667, 5
        %v670 = vsel %vm334, %v665, %v669
        %v672 = vshrl.u32 %v320, 16
        %v674 = vrot.slane %v672, 4
        %v675 = vshll.u32 %v320, 16
        %v677 = vrot.slane %v675, 5
        %v678 = vor.u32 %v674, %v677
        %v679 = vrot.slane %v678, 4
        %v681 = vshll.u32 %v321, 16
        %v683 = vrot.slane %v681, 5
        %v684 = vsel %vm334, %v679, %v683
        %v685 = vshrl.u32 %v321, 16
        %v687 = vrot.slane %v685, 4
        %v688 = vor.u32 %v687, %v683
        %v689 = vrot.slane %v688, 4
        %v691 = vshll.u32 %v322, 16
        %v693 = vrot.slane %v691, 5
        %v694 = vsel %vm334, %v689, %v693
        %v696 = vshrl.u32 %v323, 16
        %v698 = vrot.slane %v696, 4
        %v699 = vshll.u32 %v323, 16
        %v701 = vrot.slane %v699, 5
        %v702 = vor.u32 %v698, %v701
        %v703 = vrot.slane %v702, 4
        %v705 = vshll.u32 %v324, 16
        %v707 = vrot.slane %v705, 5
        %v708 = vsel %vm334, %v703, %v707
        %v709 = vshrl.u32 %v324, 16
        %v711 = vrot.slane %v709, 4
        %v712 = vor.u32 %v711, %v707
        %v713 = vrot.slane %v712, 4
        %v715 = vshll.u32 %v325, 16
        %v717 = vrot.slane %v715, 5
        %v718 = vsel %vm334, %v713, %v717
        %vm767 = vcmask 1042432
        %vm768 = vcmask 1046532
        %vm769 = vmor %vm767, %vm768
        %v770 = vrot.slane %v278, 5
        %v771 = vrot.slane %v770, 4
        %v772 = vrot.slane %v279, 5
        %v773 = vsel %vm769, %v771, %v772
        %v774 = vrot.slane %v772, 4
        %v775 = vrot.slane %v280, 5
        %v776 = vsel %vm769, %v774, %v775
        %v777 = vrot.slane %v281, 5
        %v778 = vrot.slane %v777, 4
        %v779 = vrot.slane %v282, 5
        %v780 = vsel %vm769, %v778, %v779
        %v781 = vrot.slane %v779, 4
        %v782 = vrot.slane %v283, 5
        %v783 = vsel %vm769, %v781, %v782
        %v784 = vrot.slane %v284, 5
        %v785 = vrot.slane %v784, 4
        %v786 = vrot.slane %v285, 5
        %v787 = vsel %vm769, %v785, %v786
        %v788 = vrot.slane %v786, 4
        %v789 = vrot.slane %v286, 5
        %v790 = vsel %vm769, %v788, %v789
        %v791 = vrot.slane %v287, 5
        %v792 = vrot.slane %v791, 4
        %v793 = vrot.slane %v288, 5
        %v794 = vsel %vm769, %v792, %v793
        %v795 = vrot.slane %v793, 4
        %v796 = vrot.slane %v289, 5
        %v797 = vsel %vm769, %v795, %v796
        %v798 = vrot.slane %v290, 5
        %v799 = vrot.slane %v798, 4
        %v800 = vrot.slane %v291, 5
        %v801 = vsel %vm769, %v799, %v800
        %v802 = vrot.slane %v800, 4
        %v803 = vrot.slane %v292, 5
        %v804 = vsel %vm769, %v802, %v803
        %v805 = vrot.slane %v293, 5
        %v806 = vrot.slane %v805, 4
        %v807 = vrot.slane %v294, 5
        %v808 = vsel %vm769, %v806, %v807
        %v809 = vrot.slane %v807, 4
        %v810 = vrot.slane %v295, 5
        %v811 = vsel %vm769, %v809, %v810
        %v812 = vrot.slane %v296, 5
        %v813 = vrot.slane %v812, 4
        %v814 = vrot.slane %v297, 5
        %v815 = vsel %vm769, %v813, %v814
        %v816 = vrot.slane %v814, 4
        %v817 = vrot.slane %v298, 5
        %v818 = vsel %vm769, %v816, %v817
        %v819 = vrot.slane %v299, 5
        %v820 = vrot.slane %v819, 4
        %v821 = vrot.slane %v300, 5
        %v822 = vsel %vm769, %v820, %v821
        %v823 = vrot.slane %v821, 4
        %v824 = vrot.slane %v301, 5
        %v825 = vsel %vm769, %v823, %v824
        %v826 = vrot.slane %v302, 5
        %v827 = vrot.slane %v826, 4
        %v828 = vrot.slane %v303, 5
        %v829 = vsel %vm769, %v827, %v828
        %v830 = vrot.slane %v828, 4
        %v831 = vrot.slane %v304, 5
        %v832 = vsel %vm769, %v830, %v831
        %v833 = vrot.slane %v305, 5
        %v834 = vrot.slane %v833, 4
        %v835 = vrot.slane %v306, 5
        %v836 = vsel %vm769, %v834, %v835
        %v837 = vrot.slane %v835, 4
        %v838 = vrot.slane %v307, 5
        %v839 = vsel %vm769, %v837, %v838
        %v840 = vrot.slane %v308, 5
        %v841 = vrot.slane %v840, 4
        %v842 = vrot.slane %v309, 5
        %v843 = vsel %vm769, %v841, %v842
        %v844 = vrot.slane %v842, 4
        %v845 = vrot.slane %v310, 5
        %v846 = vsel %vm769, %v844, %v845
        %v847 = vrot.slane %v311, 5
        %v848 = vrot.slane %v847, 4
        %v849 = vrot.slane %v312, 5
        %v850 = vsel %vm769, %v848, %v849
        %v851 = vrot.slane %v849, 4
        %v852 = vrot.slane %v313, 5
        %v853 = vsel %vm769, %v851, %v852
        %v854 = vrot.slane %v314, 5
        %v855 = vrot.slane %v854, 4
        %v856 = vrot.slane %v315, 5
        %v857 = vsel %vm769, %v855, %v856
        %v858 = vrot.slane %v856, 4
        %v859 = vrot.slane %v316, 5
        %v860 = vsel %vm769, %v858, %v859
        %v861 = vrot.slane %v317, 5
        %v862 = vrot.slane %v861, 4
        %v863 = vrot.slane %v318, 5
        %v864 = vsel %vm769, %v862, %v863
        %v865 = vrot.slane %v863, 4
        %v866 = vrot.slane %v319, 5
        %v867 = vsel %vm769, %v865, %v866
        %v868 = vrot.slane %v320, 5
        %v869 = vrot.slane %v868, 4
        %v870 = vrot.slane %v321, 5
        %v871 = vsel %vm769, %v869, %v870
        %v872 = vrot.slane %v870, 4
        %v873 = vrot.slane %v322, 5
        %v874 = vsel %vm769, %v872, %v873
        %v875 = vrot.slane %v323, 5
        %v876 = vrot.slane %v875, 4
        %v877 = vrot.slane %v324, 5
        %v878 = vsel %vm769, %v876, %v877
        %v879 = vrot.slane %v877, 4
        %v880 = vrot.slane %v325, 5
        %v881 = vsel %vm769, %v879, %v880
        %v883 = vshrl.u32 %v326, 16
        %v885 = vrot.slane %v883, 4
        %v886 = vshll.u32 %v326, 16
        %v888 = vrot.slane %v886, 5
        %v889 = vor.u32 %v885, %v888
        %v890 = vrot.slane %v889, 4
        %v892 = vshll.u32 %v327, 16
        %v894 = vrot.slane %v892, 5
        %v895 = vsel %vm334, %v890, %v894
        %v896 = vshrl.u32 %v327, 16
        %v898 = vrot.slane %v896, 4
        %v899 = vor.u32 %v898, %v894
        %v900 = vrot.slane %v899, 4
        %v902 = vshll.u32 %v328, 16
        %v904 = vrot.slane %v902, 5
        %v905 = vsel %vm334, %v900, %v904
        %v909 = vrot.slane %v326, 5
        %v910 = vrot.slane %v909, 4
        %v911 = vrot.slane %v327, 5
        %v912 = vsel %vm769, %v910, %v911
        %v913 = vrot.slane %v911, 4
        %v914 = vrot.slane %v328, 5
        %v915 = vsel %vm769, %v913, %v914
        %v917 = vshrl.u32 %v329, 16
        %v919 = vrot.slane %v917, 4
        %v920 = vshll.u32 %v329, 16
        %v922 = vrot.slane %v920, 5
        %v923 = vor.u32 %v919, %v922
        %v924 = vrot.slane %v923, 4
        %v926 = vshll.u32 %v330, 16
        %v928 = vrot.slane %v926, 5
        %v929 = vsel %vm334, %v924, %v928
        %v930 = vshrl.u32 %v330, 16
        %v932 = vrot.slane %v930, 4
        %v933 = vor.u32 %v932, %v928
        %v934 = vrot.slane %v933, 4
        %v936 = vshll.u32 %v331, 16
        %v938 = vrot.slane %v936, 5
        %v939 = vsel %vm334, %v934, %v938
        %v943 = vrot.slane %v329, 5
        %v944 = vrot.slane %v943, 4
        %v945 = vrot.slane %v330, 5
        %v946 = vsel %vm769, %v944, %v945
        %v947 = vrot.slane %v945, 4
        %v948 = vrot.slane %v331, 5
        %v949 = vsel %vm769, %v947, %v948
        %v950 = vunpack.c.l.b16 %v278
        %v951 = vunpack.c.l.b16 %v279
        %v952 = vunpack.c.l.b16 %v281
        %v953 = vunpack.c.l.b16 %v282
        %v954 = vunpack.c.l.b16 %v284
        %v955 = vunpack.c.l.b16 %v285
        %v956 = vunpack.c.l.b16 %v287
        %v957 = vunpack.c.l.b16 %v288
        %v958 = vunpack.c.l.b16 %v290
        %v959 = vunpack.c.l.b16 %v291
        %v960 = vunpack.c.l.b16 %v293
        %v961 = vunpack.c.l.b16 %v294
        %v962 = vunpack.c.l.b16 %v296
        %v963 = vunpack.c.l.b16 %v297
        %v964 = vunpack.c.l.b16 %v299
        %v965 = vunpack.c.l.b16 %v300
        %v966 = vunpack.c.l.b16 %v302
        %v967 = vunpack.c.l.b16 %v303
        %v968 = vunpack.c.l.b16 %v305
        %v969 = vunpack.c.l.b16 %v306
        %v970 = vunpack.c.l.b16 %v308
        %v971 = vunpack.c.l.b16 %v309
        %v972 = vunpack.c.l.b16 %v311
        %v973 = vunpack.c.l.b16 %v312
        %v974 = vunpack.c.l.b16 %v314
        %v975 = vunpack.c.l.b16 %v315
        %v976 = vunpack.c.l.b16 %v317
        %v977 = vunpack.c.l.b16 %v318
        %v978 = vunpack.c.l.b16 %v320
        %v979 = vunpack.c.l.b16 %v321
        %v980 = vunpack.c.l.b16 %v323
        %v981 = vunpack.c.l.b16 %v324
        %v982 = vpack.c.b16 %v951, %v950
        %v983 = vpack.c.b16 %v953, %v952
        %v984 = vpack.c.b16 %v955, %v954
        %v985 = vpack.c.b16 %v957, %v956
        %v986 = vpack.c.b16 %v959, %v958
        %v987 = vpack.c.b16 %v961, %v960
        %v988 = vpack.c.b16 %v963, %v962
        %v989 = vpack.c.b16 %v965, %v964
        %v990 = vpack.c.b16 %v967, %v966
        %v991 = vpack.c.b16 %v969, %v968
        %v992 = vpack.c.b16 %v971, %v970
        %v993 = vpack.c.b16 %v973, %v972
        %v994 = vpack.c.b16 %v975, %v974
        %v995 = vpack.c.b16 %v977, %v976
        %v996 = vpack.c.b16 %v979, %v978
        %v997 = vpack.c.b16 %v981, %v980
        %v1014 = vunpack.c.l.b16 %v348
        %v1015 = vunpack.c.l.b16 %v358
        %v1016 = vunpack.c.l.b16 %v372
        %v1017 = vunpack.c.l.b16 %v382
        %v1018 = vunpack.c.l.b16 %v396
        %v1019 = vunpack.c.l.b16 %v406
        %v1020 = vunpack.c.l.b16 %v420
        %v1021 = vunpack.c.l.b16 %v430
        %v1022 = vunpack.c.l.b16 %v444
        %v1023 = vunpack.c.l.b16 %v454
        %v1024 = vunpack.c.l.b16 %v468
        %v1025 = vunpack.c.l.b16 %v478
        %v1026 = vunpack.c.l.b16 %v492
        %v1027 = vunpack.c.l.b16 %v502
        %v1028 = vunpack.c.l.b16 %v516
        %v1029 = vunpack.c.l.b16 %v526
        %v1030 = vunpack.c.l.b16 %v540
        %v1031 = vunpack.c.l.b16 %v550
        %v1032 = vunpack.c.l.b16 %v564
        %v1033 = vunpack.c.l.b16 %v574
        %v1034 = vunpack.c.l.b16 %v588
        %v1035 = vunpack.c.l.b16 %v598
        %v1036 = vunpack.c.l.b16 %v612
        %v1037 = vunpack.c.l.b16 %v622
        %v1038 = vunpack.c.l.b16 %v636
        %v1039 = vunpack.c.l.b16 %v646
        %v1040 = vunpack.c.l.b16 %v660
        %v1041 = vunpack.c.l.b16 %v670
        %v1042 = vunpack.c.l.b16 %v684
        %v1043 = vunpack.c.l.b16 %v694
        %v1044 = vunpack.c.l.b16 %v708
        %v1045 = vunpack.c.l.b16 %v718
        %v1046 = vpack.c.b16 %v1015, %v1014
        %v1047 = vpack.c.b16 %v1017, %v1016
        %v1048 = vpack.c.b16 %v1019, %v1018
        %v1049 = vpack.c.b16 %v1021, %v1020
        %v1050 = vpack.c.b16 %v1023, %v1022
        %v1051 = vpack.c.b16 %v1025, %v1024
        %v1052 = vpack.c.b16 %v1027, %v1026
        %v1053 = vpack.c.b16 %v1029, %v1028
        %v1054 = vpack.c.b16 %v1031, %v1030
        %v1055 = vpack.c.b16 %v1033, %v1032
        %v1056 = vpack.c.b16 %v1035, %v1034
        %v1057 = vpack.c.b16 %v1037, %v1036
        %v1058 = vpack.c.b16 %v1039, %v1038
        %v1059 = vpack.c.b16 %v1041, %v1040
        %v1060 = vpack.c.b16 %v1043, %v1042
        %v1061 = vpack.c.b16 %v1045, %v1044
        %v1078 = vunpack.c.l.b16 %v773
        %v1079 = vunpack.c.l.b16 %v776
        %v1080 = vunpack.c.l.b16 %v780
        %v1081 = vunpack.c.l.b16 %v783
        %v1082 = vunpack.c.l.b16 %v787
        %v1083 = vunpack.c.l.b16 %v790
        %v1084 = vunpack.c.l.b16 %v794
        %v1085 = vunpack.c.l.b16 %v797
        %v1086 = vunpack.c.l.b16 %v801
        %v1087 = vunpack.c.l.b16 %v804
        %v1088 = vunpack.c.l.b16 %v808
        %v1089 = vunpack.c.l.b16 %v811
        %v1090 = vunpack.c.l.b16 %v815
        %v1091 = vunpack.c.l.b16 %v818
        %v1092 = vunpack.c.l.b16 %v822
        %v1093 = vunpack.c.l.b16 %v825
        %v1094 = vunpack.c.l.b16 %v829
        %v1095 = vunpack.c.l.b16 %v832
        %v1096 = vunpack.c.l.b16 %v836
        %v1097 = vunpack.c.l.b16 %v839
        %v1098 = vunpack.c.l.b16 %v843
        %v1099 = vunpack.c.l.b16 %v846
        %v1100 = vunpack.c.l.b16 %v850
        %v1101 = vunpack.c.l.b16 %v853
        %v1102 = vunpack.c.l.b16 %v857
        %v1103 = vunpack.c.l.b16 %v860
        %v1104 = vunpack.c.l.b16 %v864
        %v1105 = vunpack.c.l.b16 %v867
        %v1106 = vunpack.c.l.b16 %v871
        %v1107 = vunpack.c.l.b16 %v874
        %v1108 = vunpack.c.l.b16 %v878
        %v1109 = vunpack.c.l.b16 %v881
        %v1110 = vpack.c.b16 %v1079, %v1078
        %v1111 = vpack.c.b16 %v1081, %v1080
        %v1112 = vpack.c.b16 %v1083, %v1082
        %v1113 = vpack.c.b16 %v1085, %v1084
        %v1114 = vpack.c.b16 %v1087, %v1086
        %v1115 = vpack.c.b16 %v1089, %v1088
        %v1116 = vpack.c.b16 %v1091, %v1090
        %v1117 = vpack.c.b16 %v1093, %v1092
        %v1118 = vpack.c.b16 %v1095, %v1094
        %v1119 = vpack.c.b16 %v1097, %v1096
        %v1120 = vpack.c.b16 %v1099, %v1098
        %v1121 = vpack.c.b16 %v1101, %v1100
        %v1122 = vpack.c.b16 %v1103, %v1102
        %v1123 = vpack.c.b16 %v1105, %v1104
        %v1124 = vpack.c.b16 %v1107, %v1106
        %v1125 = vpack.c.b16 %v1109, %v1108
        %v1142 = vunpack.c.l.b16 %v326
        %v1143 = vunpack.c.l.b16 %v327
        %v1144 = vpack.c.b16 %v1143, %v1142
        %v1146 = vunpack.c.l.b16 %v895
        %v1147 = vunpack.c.l.b16 %v905
        %v1148 = vpack.c.b16 %v1147, %v1146
        %v1150 = vunpack.c.l.b16 %v912
        %v1151 = vunpack.c.l.b16 %v915
        %v1152 = vpack.c.b16 %v1151, %v1150
        %v1154 = vunpack.c.l.b16 %v329
        %v1155 = vunpack.c.l.b16 %v330
        %v1156 = vpack.c.b16 %v1155, %v1154
        %v1158 = vunpack.c.l.b16 %v929
        %v1159 = vunpack.c.l.b16 %v939
        %v1160 = vpack.c.b16 %v1159, %v1158
        %v1162 = vunpack.c.l.b16 %v946
        %v1163 = vunpack.c.l.b16 %v949
        %v1164 = vpack.c.b16 %v1163, %v1162
        %v1166 = vld [vmem:[%s1] sm:$0xf]
        %v1167 = vld [vmem:[%s1 + $0x4] sm:$0xf]
        %v1168 = vld [vmem:[%s1 + $0x8] sm:$0xf]
        %v1169 = vld [vmem:[%s1 + $0xc] sm:$0xf]
        %v1170 = vld [vmem:[%s1 + $0x10] sm:$0xf]
        %v1171 = vld [vmem:[%s1 + $0x14] sm:$0xf]
        %v1172 = vld [vmem:[%s1 + $0x18] sm:$0xf]
        %v1173 = vld [vmem:[%s1 + $0x1c] sm:$0xf]
        %v1174 = vld [vmem:[%s1 + $0x20] sm:$0xf]
        %v1175 = vld [vmem:[%s1 + $0x24] sm:$0xf]
        %v1176 = vld [vmem:[%s1 + $0x28] sm:$0xf]
        %v1177 = vld [vmem:[%s1 + $0x2c] sm:$0xf]
        %v1178 = vld [vmem:[%s1 + $0x30] sm:$0xf]
        %v1179 = vld [vmem:[%s1 + $0x34] sm:$0xf]
        %v1180 = vld [vmem:[%s1 + $0x38] sm:$0xf]
        %v1181 = vld [vmem:[%s1 + $0x3c] sm:$0xf]
        %v1182 = vld [vmem:[%s1 + $0x40] sm:$0xf]
        %v1183 = vld [vmem:[%s1 + $0x44] sm:$0xf]
        %v1184 = vld [vmem:[%s1 + $0x48] sm:$0xf]
        %v1185 = vld [vmem:[%s1 + $0x4c] sm:$0xf]
        %v1186 = vld [vmem:[%s1 + $0x50] sm:$0xf]
        %v1187 = vld [vmem:[%s1 + $0x54] sm:$0xf]
        %v1188 = vld [vmem:[%s1 + $0x58] sm:$0xf]
        %v1189 = vld [vmem:[%s1 + $0x5c] sm:$0xf]
        %v1190 = vld [vmem:[%s1 + $0x60] sm:$0xf]
        %v1191 = vld [vmem:[%s1 + $0x64] sm:$0xf]
        %v1192 = vld [vmem:[%s1 + $0x68] sm:$0xf]
        %v1193 = vld [vmem:[%s1 + $0x6c] sm:$0xf]
        %v1194 = vld [vmem:[%s1 + $0x70] sm:$0xf]
        %v1195 = vld [vmem:[%s1 + $0x74] sm:$0xf]
        %v1196 = vld [vmem:[%s1 + $0x78] sm:$0xf]
        %v1197 = vld [vmem:[%s1 + $0x7c] sm:$0xf]
        %v1198 = vld [vmem:[%s1 + $0x80] sm:$0xf]
        %v1199 = vld [vmem:[%s1 + $0x84] sm:$0xf]
        %v1200 = vld [vmem:[%s1 + $0x88] sm:$0xf]
        %v1201 = vld [vmem:[%s1 + $0x8c] sm:$0xf]
        %v1202 = vld [vmem:[%s1 + $0x90] sm:$0xf]
        %v1203 = vld [vmem:[%s1 + $0x94] sm:$0xf]
        %v1204 = vld [vmem:[%s1 + $0x98] sm:$0xf]
        %v1205 = vld [vmem:[%s1 + $0x9c] sm:$0xf]
        %v1206 = vld [vmem:[%s1 + $0xa0] sm:$0xf]
        %v1207 = vld [vmem:[%s1 + $0xa4] sm:$0xf]
        %v1208 = vld [vmem:[%s1 + $0xa8] sm:$0xf]
        %v1209 = vld [vmem:[%s1 + $0xac] sm:$0xf]
        %v1210 = vld [vmem:[%s1 + $0xb0] sm:$0xf]
        %v1211 = vld [vmem:[%s1 + $0xb4] sm:$0xf]
        %v1212 = vld [vmem:[%s1 + $0xb8] sm:$0xf]
        %v1213 = vld [vmem:[%s1 + $0xbc] sm:$0xf]
        %v1214 = vld [vmem:[%s1 + $0xc0] sm:$0xf]
        %v1215 = vld [vmem:[%s1 + $0xc4] sm:$0xf]
        %v1216 = vld [vmem:[%s1 + $0xc8] sm:$0xf]
        %v1217 = vld [vmem:[%s1 + $0xcc] sm:$0xf]
        %v1218 = vld [vmem:[%s1 + $0xd0] sm:$0xf]
        %v1219 = vld [vmem:[%s1 + $0xd4] sm:$0xf]
        %v1220 = vld [vmem:[%s1 + $0xd8] sm:$0xf]
        %v1221 = vld [vmem:[%s1 + $0xdc] sm:$0xf]
        %v1222 = vld [vmem:[%s1 + $0xe0] sm:$0xf]
        %v1223 = vld [vmem:[%s1 + $0xe4] sm:$0xf]
        %v1224 = vld [vmem:[%s1 + $0xe8] sm:$0xf]
        %v1225 = vld [vmem:[%s1 + $0xec] sm:$0xf]
        %v1226 = vld [vmem:[%s1 + $0xf0] sm:$0xf]
        %v1227 = vld [vmem:[%s1 + $0xf4] sm:$0xf]
        %v1228 = vld [vmem:[%s1 + $0xf8] sm:$0xf]
        %v1229 = vld [vmem:[%s1 + $0xfc] sm:$0xf]
        %v1230 = vld [vmem:[%s1 + $0x100] sm:$0xf]
        %v1231 = vld [vmem:[%s1 + $0x104] sm:$0xf]
        %v1232 = vld [vmem:[%s1 + $0x108] sm:$0xf]
        %v1233 = vld [vmem:[%s1 + $0x10c] sm:$0xf]
        %v1234 = vld [vmem:[%s1 + $0x110] sm:$0xf]
        %v1235 = vld [vmem:[%s1 + $0x114] sm:$0xf]
        %v1236 = vld [vmem:[%s1 + $0x118] sm:$0xf]
        %v1237 = vld [vmem:[%s1 + $0x11c] sm:$0xf]
        %v1238 = vld [vmem:[%s1 + $0x120] sm:$0xf]
        %v1239 = vld [vmem:[%s1 + $0x124] sm:$0xf]
        %v1240 = vld [vmem:[%s1 + $0x128] sm:$0xf]
        %v1241 = vld [vmem:[%s1 + $0x12c] sm:$0xf]
        %v1242 = vld [vmem:[%s1 + $0x130] sm:$0xf]
        %v1243 = vld [vmem:[%s1 + $0x134] sm:$0xf]
        %v1244 = vld [vmem:[%s1 + $0x138] sm:$0xf]
        %v1245 = vld [vmem:[%s1 + $0x13c] sm:$0xf]
        %v1246 = vld [vmem:[%s1 + $0x140] sm:$0xf]
        %v1247 = vld [vmem:[%s1 + $0x144] sm:$0xf]
        %v1248 = vld [vmem:[%s1 + $0x148] sm:$0xf]
        %v1249 = vld [vmem:[%s1 + $0x14c] sm:$0xf]
        %v1250 = vld [vmem:[%s1 + $0x150] sm:$0xf]
        %v1251 = vld [vmem:[%s1 + $0x154] sm:$0xf]
        %v1252 = vld [vmem:[%s1 + $0x158] sm:$0xf]
        %v1253 = vld [vmem:[%s1 + $0x15c] sm:$0xf]
        %v1254 = vld [vmem:[%s1 + $0x160] sm:$0xf]
        %v1255 = vld [vmem:[%s1 + $0x164] sm:$0xf]
        %v1256 = vld [vmem:[%s1 + $0x168] sm:$0xf]
        %v1257 = vld [vmem:[%s1 + $0x16c] sm:$0xf]
        %v1258 = vld [vmem:[%s1 + $0x170] sm:$0xf]
        %v1259 = vld [vmem:[%s1 + $0x174] sm:$0xf]
        %v1260 = vld [vmem:[%s1 + $0x178] sm:$0xf]
        %v1261 = vld [vmem:[%s1 + $0x17c] sm:$0xf]
        %v1262 = vld [vmem:[%s1 + $0x180] sm:$0xf]
        %v1263 = vld [vmem:[%s1 + $0x184] sm:$0xf]
        %v1264 = vld [vmem:[%s1 + $0x188] sm:$0xf]
        %v1265 = vld [vmem:[%s1 + $0x18c] sm:$0xf]
        %v1266 = vld [vmem:[%s1 + $0x190] sm:$0xf]
        %v1267 = vld [vmem:[%s1 + $0x194] sm:$0xf]
        %v1268 = vld [vmem:[%s1 + $0x198] sm:$0xf]
        %v1269 = vld [vmem:[%s1 + $0x19c] sm:$0xf]
        %v1270 = vld [vmem:[%s1 + $0x1a0] sm:$0xf]
        %v1271 = vld [vmem:[%s1 + $0x1a4] sm:$0xf]
        %v1272 = vld [vmem:[%s1 + $0x1a8] sm:$0xf]
        %v1273 = vld [vmem:[%s1 + $0x1ac] sm:$0xf]
        %v1274 = vld [vmem:[%s1 + $0x1b0] sm:$0xf]
        %v1275 = vld [vmem:[%s1 + $0x1b4] sm:$0xf]
        %v1276 = vld [vmem:[%s1 + $0x1b8] sm:$0xf]
        %v1277 = vld [vmem:[%s1 + $0x1bc] sm:$0xf]
        %v1278 = vld [vmem:[%s1 + $0x1c0] sm:$0xf]
        %v1279 = vld [vmem:[%s1 + $0x1c4] sm:$0xf]
        %v1280 = vld [vmem:[%s1 + $0x1c8] sm:$0xf]
        %v1281 = vld [vmem:[%s1 + $0x1cc] sm:$0xf]
        %v1282 = vld [vmem:[%s1 + $0x1d0] sm:$0xf]
        %v1283 = vld [vmem:[%s1 + $0x1d4] sm:$0xf]
        %v1284 = vld [vmem:[%s1 + $0x1d8] sm:$0xf]
        %v1285 = vld [vmem:[%s1 + $0x1dc] sm:$0xf]
        %v1286 = vld [vmem:[%s1 + $0x1e0] sm:$0xf]
        %v1287 = vld [vmem:[%s1 + $0x1e4] sm:$0xf]
        %v1288 = vld [vmem:[%s1 + $0x1e8] sm:$0xf]
        %v1289 = vld [vmem:[%s1 + $0x1ec] sm:$0xf]
        %v1290 = vld [vmem:[%s1 + $0x1f0] sm:$0xf]
        %v1291 = vld [vmem:[%s1 + $0x1f4] sm:$0xf]
        %v1292 = vld [vmem:[%s1 + $0x1f8] sm:$0xf]
        %v1293 = vld [vmem:[%s1 + $0x1fc] sm:$0xf]
        %v1294 = vld [vmem:[%s1 + $0x200] sm:$0xf]
        %v1295 = vld [vmem:[%s1 + $0x204] sm:$0xf]
        %v1296 = vld [vmem:[%s1 + $0x208] sm:$0xf]
        %v1297 = vld [vmem:[%s1 + $0x20c] sm:$0xf]
        %v1298 = vld [vmem:[%s1 + $0x210] sm:$0xf]
        %v1299 = vld [vmem:[%s1 + $0x214] sm:$0xf]
        %v1300 = vld [vmem:[%s1 + $0x218] sm:$0xf]
        %v1301 = vld [vmem:[%s1 + $0x21c] sm:$0xf]
        %v1302 = vld [vmem:[%s1 + $0x220] sm:$0xf]
        %v1303 = vld [vmem:[%s1 + $0x224] sm:$0xf]
        %v1304 = vld [vmem:[%s1 + $0x228] sm:$0xf]
        %v1305 = vld [vmem:[%s1 + $0x22c] sm:$0xf]
        %v1306 = vld [vmem:[%s1 + $0x230] sm:$0xf]
        %v1307 = vld [vmem:[%s1 + $0x234] sm:$0xf]
        %v1308 = vld [vmem:[%s1 + $0x238] sm:$0xf]
        %v1309 = vld [vmem:[%s1 + $0x23c] sm:$0xf]
        %v1454 = vunpack.c.l.b16 %v1166
        %v1455 = vunpack.c.l.b16 %v1167
        %v1456 = vunpack.c.l.b16 %v1168
        %v1457 = vunpack.c.l.b16 %v1169
        %v1458 = vunpack.c.l.b16 %v1170
        %v1459 = vunpack.c.l.b16 %v1171
        %v1460 = vunpack.c.l.b16 %v1172
        %v1461 = vunpack.c.l.b16 %v1173
        %v1462 = vunpack.c.l.b16 %v1174
        %v1463 = vunpack.c.l.b16 %v1175
        %v1464 = vunpack.c.l.b16 %v1176
        %v1465 = vunpack.c.l.b16 %v1177
        %v1466 = vunpack.c.l.b16 %v1178
        %v1467 = vunpack.c.l.b16 %v1179
        %v1468 = vunpack.c.l.b16 %v1180
        %v1469 = vunpack.c.l.b16 %v1181
        %v1470 = vunpack.c.l.b16 %v1182
        %v1471 = vunpack.c.l.b16 %v1183
        %v1472 = vunpack.c.l.b16 %v1184
        %v1473 = vunpack.c.l.b16 %v1185
        %v1474 = vunpack.c.l.b16 %v1186
        %v1475 = vunpack.c.l.b16 %v1187
        %v1476 = vunpack.c.l.b16 %v1188
        %v1477 = vunpack.c.l.b16 %v1189
        %v1478 = vunpack.c.l.b16 %v1190
        %v1479 = vunpack.c.l.b16 %v1191
        %v1480 = vunpack.c.l.b16 %v1192
        %v1481 = vunpack.c.l.b16 %v1193
        %v1482 = vunpack.c.l.b16 %v1194
        %v1483 = vunpack.c.l.b16 %v1195
        %v1484 = vunpack.c.l.b16 %v1196
        %v1485 = vunpack.c.l.b16 %v1197
        %v1486 = vunpack.c.l.b16 %v1198
        %v1487 = vunpack.c.l.b16 %v1199
        %v1488 = vunpack.c.l.b16 %v1200
        %v1489 = vunpack.c.l.b16 %v1201
        %v1490 = vunpack.c.l.b16 %v1202
        %v1491 = vunpack.c.l.b16 %v1203
        %v1492 = vunpack.c.l.b16 %v1204
        %v1493 = vunpack.c.l.b16 %v1205
        %v1494 = vunpack.c.l.b16 %v1206
        %v1495 = vunpack.c.l.b16 %v1207
        %v1496 = vunpack.c.l.b16 %v1208
        %v1497 = vunpack.c.l.b16 %v1209
        %v1498 = vunpack.c.l.b16 %v1210
        %v1499 = vunpack.c.l.b16 %v1211
        %v1500 = vunpack.c.l.b16 %v1212
        %v1501 = vunpack.c.l.b16 %v1213
        %v1502 = vunpack.c.l.b16 %v1214
        %v1503 = vunpack.c.l.b16 %v1215
        %v1504 = vunpack.c.l.b16 %v1216
        %v1505 = vunpack.c.l.b16 %v1217
        %v1506 = vunpack.c.l.b16 %v1218
        %v1507 = vunpack.c.l.b16 %v1219
        %v1508 = vunpack.c.l.b16 %v1220
        %v1509 = vunpack.c.l.b16 %v1221
        %v1510 = vunpack.c.l.b16 %v1222
        %v1511 = vunpack.c.l.b16 %v1223
        %v1512 = vunpack.c.l.b16 %v1224
        %v1513 = vunpack.c.l.b16 %v1225
        %v1514 = vunpack.c.l.b16 %v1226
        %v1515 = vunpack.c.l.b16 %v1227
        %v1516 = vunpack.c.l.b16 %v1228
        %v1517 = vunpack.c.l.b16 %v1229
        %v1518 = vunpack.c.l.b16 %v1230
        %v1519 = vunpack.c.l.b16 %v1231
        %v1520 = vunpack.c.l.b16 %v1232
        %v1521 = vunpack.c.l.b16 %v1233
        %v1522 = vunpack.c.l.b16 %v1234
        %v1523 = vunpack.c.l.b16 %v1235
        %v1524 = vunpack.c.l.b16 %v1236
        %v1525 = vunpack.c.l.b16 %v1237
        %v1526 = vunpack.c.l.b16 %v1238
        %v1527 = vunpack.c.l.b16 %v1239
        %v1528 = vunpack.c.l.b16 %v1240
        %v1529 = vunpack.c.l.b16 %v1241
        %v1530 = vunpack.c.l.b16 %v1242
        %v1531 = vunpack.c.l.b16 %v1243
        %v1532 = vunpack.c.l.b16 %v1244
        %v1533 = vunpack.c.l.b16 %v1245
        %v1534 = vunpack.c.l.b16 %v1246
        %v1535 = vunpack.c.l.b16 %v1247
        %v1536 = vunpack.c.l.b16 %v1248
        %v1537 = vunpack.c.l.b16 %v1249
        %v1538 = vunpack.c.l.b16 %v1250
        %v1539 = vunpack.c.l.b16 %v1251
        %v1540 = vunpack.c.l.b16 %v1252
        %v1541 = vunpack.c.l.b16 %v1253
        %v1542 = vunpack.c.l.b16 %v1254
        %v1543 = vunpack.c.l.b16 %v1255
        %v1544 = vunpack.c.l.b16 %v1256
        %v1545 = vunpack.c.l.b16 %v1257
        %v1546 = vunpack.c.l.b16 %v1258
        %v1547 = vunpack.c.l.b16 %v1259
        %v1548 = vunpack.c.l.b16 %v1260
        %v1549 = vunpack.c.l.b16 %v1261
        %v1550 = vunpack.c.l.b16 %v1262
        %v1551 = vunpack.c.l.b16 %v1263
        %v1552 = vunpack.c.l.b16 %v1264
        %v1553 = vunpack.c.l.b16 %v1265
        %v1554 = vunpack.c.l.b16 %v1266
        %v1555 = vunpack.c.l.b16 %v1267
        %v1556 = vunpack.c.l.b16 %v1268
        %v1557 = vunpack.c.l.b16 %v1269
        %v1558 = vunpack.c.l.b16 %v1270
        %v1559 = vunpack.c.l.b16 %v1271
        %v1560 = vunpack.c.l.b16 %v1272
        %v1561 = vunpack.c.l.b16 %v1273
        %v1562 = vunpack.c.l.b16 %v1274
        %v1563 = vunpack.c.l.b16 %v1275
        %v1564 = vunpack.c.l.b16 %v1276
        %v1565 = vunpack.c.l.b16 %v1277
        %v1566 = vunpack.c.l.b16 %v1278
        %v1567 = vunpack.c.l.b16 %v1279
        %v1568 = vunpack.c.l.b16 %v1280
        %v1569 = vunpack.c.l.b16 %v1281
        %v1570 = vunpack.c.l.b16 %v1282
        %v1571 = vunpack.c.l.b16 %v1283
        %v1572 = vunpack.c.l.b16 %v1284
        %v1573 = vunpack.c.l.b16 %v1285
        %v1574 = vunpack.c.l.b16 %v1286
        %v1575 = vunpack.c.l.b16 %v1287
        %v1576 = vunpack.c.l.b16 %v1288
        %v1577 = vunpack.c.l.b16 %v1289
        %v1578 = vunpack.c.l.b16 %v1290
        %v1579 = vunpack.c.l.b16 %v1291
        %v1580 = vunpack.c.l.b16 %v1292
        %v1581 = vunpack.c.l.b16 %v1293
        %v1582 = vunpack.c.l.b16 %v1294
        %v1583 = vunpack.c.l.b16 %v1295
        %v1584 = vunpack.c.l.b16 %v1296
        %v1585 = vunpack.c.l.b16 %v1297
        %v1586 = vunpack.c.l.b16 %v1298
        %v1587 = vunpack.c.l.b16 %v1299
        %v1588 = vunpack.c.l.b16 %v1300
        %v1589 = vunpack.c.l.b16 %v1301
        %v1590 = vunpack.c.l.b16 %v1302
        %v1591 = vunpack.c.l.b16 %v1303
        %v1592 = vunpack.c.l.b16 %v1304
        %v1593 = vunpack.c.l.b16 %v1305
        %v1594 = vunpack.c.l.b16 %v1306
        %v1595 = vunpack.c.l.b16 %v1307
        %v1596 = vunpack.c.l.b16 %v1308
        %v1597 = vunpack.c.l.b16 %v1309
        %v1598 = vpack.c.b16 %v1455, %v1454
        %v1599 = vpack.c.b16 %v1457, %v1456
        %v1600 = vpack.c.b16 %v1459, %v1458
        %v1601 = vpack.c.b16 %v1461, %v1460
        %v1602 = vpack.c.b16 %v1463, %v1462
        %v1603 = vpack.c.b16 %v1465, %v1464
        %v1604 = vpack.c.b16 %v1467, %v1466
        %v1605 = vpack.c.b16 %v1469, %v1468
        %v1606 = vpack.c.b16 %v1471, %v1470
        %v1607 = vpack.c.b16 %v1473, %v1472
        %v1608 = vpack.c.b16 %v1475, %v1474
        %v1609 = vpack.c.b16 %v1477, %v1476
        %v1610 = vpack.c.b16 %v1479, %v1478
        %v1611 = vpack.c.b16 %v1481, %v1480
        %v1612 = vpack.c.b16 %v1483, %v1482
        %v1613 = vpack.c.b16 %v1485, %v1484
        %v1614 = vpack.c.b16 %v1487, %v1486
        %v1615 = vpack.c.b16 %v1489, %v1488
        %v1616 = vpack.c.b16 %v1491, %v1490
        %v1617 = vpack.c.b16 %v1493, %v1492
        %v1618 = vpack.c.b16 %v1495, %v1494
        %v1619 = vpack.c.b16 %v1497, %v1496
        %v1620 = vpack.c.b16 %v1499, %v1498
        %v1621 = vpack.c.b16 %v1501, %v1500
        %v1622 = vpack.c.b16 %v1503, %v1502
        %v1623 = vpack.c.b16 %v1505, %v1504
        %v1624 = vpack.c.b16 %v1507, %v1506
        %v1625 = vpack.c.b16 %v1509, %v1508
        %v1626 = vpack.c.b16 %v1511, %v1510
        %v1627 = vpack.c.b16 %v1513, %v1512
        %v1628 = vpack.c.b16 %v1515, %v1514
        %v1629 = vpack.c.b16 %v1517, %v1516
        %v1630 = vpack.c.b16 %v1519, %v1518
        %v1631 = vpack.c.b16 %v1521, %v1520
        %v1632 = vpack.c.b16 %v1523, %v1522
        %v1633 = vpack.c.b16 %v1525, %v1524
        %v1634 = vpack.c.b16 %v1527, %v1526
        %v1635 = vpack.c.b16 %v1529, %v1528
        %v1636 = vpack.c.b16 %v1531, %v1530
        %v1637 = vpack.c.b16 %v1533, %v1532
        %v1638 = vpack.c.b16 %v1535, %v1534
        %v1639 = vpack.c.b16 %v1537, %v1536
        %v1640 = vpack.c.b16 %v1539, %v1538
        %v1641 = vpack.c.b16 %v1541, %v1540
        %v1642 = vpack.c.b16 %v1543, %v1542
        %v1643 = vpack.c.b16 %v1545, %v1544
        %v1644 = vpack.c.b16 %v1547, %v1546
        %v1645 = vpack.c.b16 %v1549, %v1548
        %v1646 = vpack.c.b16 %v1551, %v1550
        %v1647 = vpack.c.b16 %v1553, %v1552
        %v1648 = vpack.c.b16 %v1555, %v1554
        %v1649 = vpack.c.b16 %v1557, %v1556
        %v1650 = vpack.c.b16 %v1559, %v1558
        %v1651 = vpack.c.b16 %v1561, %v1560
        %v1652 = vpack.c.b16 %v1563, %v1562
        %v1653 = vpack.c.b16 %v1565, %v1564
        %v1654 = vpack.c.b16 %v1567, %v1566
        %v1655 = vpack.c.b16 %v1569, %v1568
        %v1656 = vpack.c.b16 %v1571, %v1570
        %v1657 = vpack.c.b16 %v1573, %v1572
        %v1658 = vpack.c.b16 %v1575, %v1574
        %v1659 = vpack.c.b16 %v1577, %v1576
        %v1660 = vpack.c.b16 %v1579, %v1578
        %v1661 = vpack.c.b16 %v1581, %v1580
        %v1662 = vpack.c.b16 %v1583, %v1582
        %v1663 = vpack.c.b16 %v1585, %v1584
        %v1664 = vpack.c.b16 %v1587, %v1586
        %v1665 = vpack.c.b16 %v1589, %v1588
        %v1666 = vpack.c.b16 %v1591, %v1590
        %v1667 = vpack.c.b16 %v1593, %v1592
        %v1668 = vpack.c.b16 %v1595, %v1594
        %v1669 = vpack.c.b16 %v1597, %v1596
        %1742 = vmatpush.bf16.msra.mxu0 %v1605
        %1743 = vmatpush.bf16.msra.mxu0 %v1604
        %1744 = vmatpush.bf16.msra.mxu0 %v1603
        %1745 = vmatpush.bf16.msra.mxu0 %v1602
        %1746 = vmatpush.bf16.msra.mxu0 %v1601
        %1747 = vmatpush.bf16.msra.mxu0 %v1600
        %1748 = vmatpush.bf16.msra.mxu0 %v1599
        %1749 = vmatpush.bf16.msra.mxu0 %v1598
        %1750 = vmatmul.bf16.gmra.mxu0 %v982
        %v1751 = vpop.f32.mrf.mxu0
        %v1752 = vadd.f32 0.0, %v1751
        %v1753 = vpop.f32.mrf.mxu0
        %v1754 = vadd.f32 0.0, %v1753
        %1755 = vmatmul.bf16.gmra.mxu0 %v983
        %v1756 = vpop.f32.mrf.mxu0
        %v1757 = vadd.f32 0.0, %v1756
        %v1758 = vpop.f32.mrf.mxu0
        %v1759 = vadd.f32 0.0, %v1758
        %1760 = vmatmul.bf16.gmra.mxu0 %v984
        %v1761 = vpop.f32.mrf.mxu0
        %v1762 = vadd.f32 0.0, %v1761
        %v1763 = vpop.f32.mrf.mxu0
        %v1764 = vadd.f32 0.0, %v1763
        %1765 = vmatmul.bf16.gmra.mxu0 %v985
        %v1766 = vpop.f32.mrf.mxu0
        %v1767 = vadd.f32 0.0, %v1766
        %v1768 = vpop.f32.mrf.mxu0
        %v1769 = vadd.f32 0.0, %v1768
        %1770 = vmatmul.bf16.gmra.mxu0 %v986
        %v1771 = vpop.f32.mrf.mxu0
        %v1772 = vadd.f32 0.0, %v1771
        %v1773 = vpop.f32.mrf.mxu0
        %v1774 = vadd.f32 0.0, %v1773
        %1775 = vmatmul.bf16.gmra.mxu0 %v987
        %v1776 = vpop.f32.mrf.mxu0
        %v1777 = vadd.f32 0.0, %v1776
        %v1778 = vpop.f32.mrf.mxu0
        %v1779 = vadd.f32 0.0, %v1778
        %1780 = vmatmul.bf16.gmra.mxu0 %v988
        %v1781 = vpop.f32.mrf.mxu0
        %v1782 = vadd.f32 0.0, %v1781
        %v1783 = vpop.f32.mrf.mxu0
        %v1784 = vadd.f32 0.0, %v1783
        %1785 = vmatmul.bf16.gmra.mxu0 %v989
        %v1786 = vpop.f32.mrf.mxu0
        %v1787 = vadd.f32 0.0, %v1786
        %v1788 = vpop.f32.mrf.mxu0
        %v1789 = vadd.f32 0.0, %v1788
        %1790 = vmatmul.bf16.gmra.mxu0 %v990
        %v1791 = vpop.f32.mrf.mxu0
        %v1792 = vadd.f32 0.0, %v1791
        %v1793 = vpop.f32.mrf.mxu0
        %v1794 = vadd.f32 0.0, %v1793
        %1795 = vmatmul.bf16.gmra.mxu0 %v991
        %v1796 = vpop.f32.mrf.mxu0
        %v1797 = vadd.f32 0.0, %v1796
        %v1798 = vpop.f32.mrf.mxu0
        %v1799 = vadd.f32 0.0, %v1798
        %1800 = vmatmul.bf16.gmra.mxu0 %v992
        %v1801 = vpop.f32.mrf.mxu0
        %v1802 = vadd.f32 0.0, %v1801
        %v1803 = vpop.f32.mrf.mxu0
        %v1804 = vadd.f32 0.0, %v1803
        %1805 = vmatmul.bf16.gmra.mxu0 %v993
        %v1806 = vpop.f32.mrf.mxu0
        %v1807 = vadd.f32 0.0, %v1806
        %v1808 = vpop.f32.mrf.mxu0
        %v1809 = vadd.f32 0.0, %v1808
        %1810 = vmatmul.bf16.gmra.mxu0 %v994
        %v1811 = vpop.f32.mrf.mxu0
        %v1812 = vadd.f32 0.0, %v1811
        %v1813 = vpop.f32.mrf.mxu0
        %v1814 = vadd.f32 0.0, %v1813
        %1815 = vmatmul.bf16.gmra.mxu0 %v995
        %v1816 = vpop.f32.mrf.mxu0
        %v1817 = vadd.f32 0.0, %v1816
        %v1818 = vpop.f32.mrf.mxu0
        %v1819 = vadd.f32 0.0, %v1818
        %1820 = vmatmul.bf16.gmra.mxu0 %v996
        %v1821 = vpop.f32.mrf.mxu0
        %v1822 = vadd.f32 0.0, %v1821
        %v1823 = vpop.f32.mrf.mxu0
        %v1824 = vadd.f32 0.0, %v1823
        %1825 = vmatmul.bf16.gmra.mxu0 %v997
        %v1826 = vpop.f32.mrf.mxu0
        %v1827 = vadd.f32 0.0, %v1826
        %v1828 = vpop.f32.mrf.mxu0
        %v1829 = vadd.f32 0.0, %v1828
        %1830 = vdwg.mxu0
        %1831 = vmatpush.bf16.msra.mxu0 %v1613
        %1832 = vmatpush.bf16.msra.mxu0 %v1612
        %1833 = vmatpush.bf16.msra.mxu0 %v1611
        %1834 = vmatpush.bf16.msra.mxu0 %v1610
        %1835 = vmatpush.bf16.msra.mxu0 %v1609
        %1836 = vmatpush.bf16.msra.mxu0 %v1608
        %1837 = vmatpush.bf16.msra.mxu0 %v1607
        %1838 = vmatpush.bf16.msra.mxu0 %v1606
        %1839 = vmatmul.bf16.gmra.mxu0 %v1046
        %v1840 = vpop.f32.mrf.mxu0
        %v1841 = vadd.f32 %v1752, %v1840
        %v1842 = vpop.f32.mrf.mxu0
        %v1843 = vadd.f32 %v1754, %v1842
        %1844 = vmatmul.bf16.gmra.mxu0 %v1047
        %v1845 = vpop.f32.mrf.mxu0
        %v1846 = vadd.f32 %v1757, %v1845
        %v1847 = vpop.f32.mrf.mxu0
        %v1848 = vadd.f32 %v1759, %v1847
        %1849 = vmatmul.bf16.gmra.mxu0 %v1048
        %v1850 = vpop.f32.mrf.mxu0
        %v1851 = vadd.f32 %v1762, %v1850
        %v1852 = vpop.f32.mrf.mxu0
        %v1853 = vadd.f32 %v1764, %v1852
        %1854 = vmatmul.bf16.gmra.mxu0 %v1049
        %v1855 = vpop.f32.mrf.mxu0
        %v1856 = vadd.f32 %v1767, %v1855
        %v1857 = vpop.f32.mrf.mxu0
        %v1858 = vadd.f32 %v1769, %v1857
        %1859 = vmatmul.bf16.gmra.mxu0 %v1050
        %v1860 = vpop.f32.mrf.mxu0
        %v1861 = vadd.f32 %v1772, %v1860
        %v1862 = vpop.f32.mrf.mxu0
        %v1863 = vadd.f32 %v1774, %v1862
        %1864 = vmatmul.bf16.gmra.mxu0 %v1051
        %v1865 = vpop.f32.mrf.mxu0
        %v1866 = vadd.f32 %v1777, %v1865
        %v1867 = vpop.f32.mrf.mxu0
        %v1868 = vadd.f32 %v1779, %v1867
        %1869 = vmatmul.bf16.gmra.mxu0 %v1052
        %v1870 = vpop.f32.mrf.mxu0
        %v1871 = vadd.f32 %v1782, %v1870
        %v1872 = vpop.f32.mrf.mxu0
        %v1873 = vadd.f32 %v1784, %v1872
        %1874 = vmatmul.bf16.gmra.mxu0 %v1053
        %v1875 = vpop.f32.mrf.mxu0
        %v1876 = vadd.f32 %v1787, %v1875
        %v1877 = vpop.f32.mrf.mxu0
        %v1878 = vadd.f32 %v1789, %v1877
        %1879 = vmatmul.bf16.gmra.mxu0 %v1054
        %v1880 = vpop.f32.mrf.mxu0
        %v1881 = vadd.f32 %v1792, %v1880
        %v1882 = vpop.f32.mrf.mxu0
        %v1883 = vadd.f32 %v1794, %v1882
        %1884 = vmatmul.bf16.gmra.mxu0 %v1055
        %v1885 = vpop.f32.mrf.mxu0
        %v1886 = vadd.f32 %v1797, %v1885
        %v1887 = vpop.f32.mrf.mxu0
        %v1888 = vadd.f32 %v1799, %v1887
        %1889 = vmatmul.bf16.gmra.mxu0 %v1056
        %v1890 = vpop.f32.mrf.mxu0
        %v1891 = vadd.f32 %v1802, %v1890
        %v1892 = vpop.f32.mrf.mxu0
        %v1893 = vadd.f32 %v1804, %v1892
        %1894 = vmatmul.bf16.gmra.mxu0 %v1057
        %v1895 = vpop.f32.mrf.mxu0
        %v1896 = vadd.f32 %v1807, %v1895
        %v1897 = vpop.f32.mrf.mxu0
        %v1898 = vadd.f32 %v1809, %v1897
        %1899 = vmatmul.bf16.gmra.mxu0 %v1058
        %v1900 = vpop.f32.mrf.mxu0
        %v1901 = vadd.f32 %v1812, %v1900
        %v1902 = vpop.f32.mrf.mxu0
        %v1903 = vadd.f32 %v1814, %v1902
        %1904 = vmatmul.bf16.gmra.mxu0 %v1059
        %v1905 = vpop.f32.mrf.mxu0
        %v1906 = vadd.f32 %v1817, %v1905
        %v1907 = vpop.f32.mrf.mxu0
        %v1908 = vadd.f32 %v1819, %v1907
        %1909 = vmatmul.bf16.gmra.mxu0 %v1060
        %v1910 = vpop.f32.mrf.mxu0
        %v1911 = vadd.f32 %v1822, %v1910
        %v1912 = vpop.f32.mrf.mxu0
        %v1913 = vadd.f32 %v1824, %v1912
        %1914 = vmatmul.bf16.gmra.mxu0 %v1061
        %v1915 = vpop.f32.mrf.mxu0
        %v1916 = vadd.f32 %v1827, %v1915
        %v1917 = vpop.f32.mrf.mxu0
        %v1918 = vadd.f32 %v1829, %v1917
        %1919 = vdwg.mxu0
        %1920 = vmatpush.bf16.msra.mxu0 %v1621
        %1921 = vmatpush.bf16.msra.mxu0 %v1620
        %1922 = vmatpush.bf16.msra.mxu0 %v1619
        %1923 = vmatpush.bf16.msra.mxu0 %v1618
        %1924 = vmatpush.bf16.msra.mxu0 %v1617
        %1925 = vmatpush.bf16.msra.mxu0 %v1616
        %1926 = vmatpush.bf16.msra.mxu0 %v1615
        %1927 = vmatpush.bf16.msra.mxu0 %v1614
        %1928 = vmatmul.bf16.gmra.mxu0 %v1110
        %v1929 = vpop.f32.mrf.mxu0
        %v1930 = vadd.f32 %v1841, %v1929
        %v1931 = vpop.f32.mrf.mxu0
        %v1932 = vadd.f32 %v1843, %v1931
        %1933 = vmatmul.bf16.gmra.mxu0 %v1111
        %v1934 = vpop.f32.mrf.mxu0
        %v1935 = vadd.f32 %v1846, %v1934
        %v1936 = vpop.f32.mrf.mxu0
        %v1937 = vadd.f32 %v1848, %v1936
        %1938 = vmatmul.bf16.gmra.mxu0 %v1112
        %v1939 = vpop.f32.mrf.mxu0
        %v1940 = vadd.f32 %v1851, %v1939
        %v1941 = vpop.f32.mrf.mxu0
        %v1942 = vadd.f32 %v1853, %v1941
        %1943 = vmatmul.bf16.gmra.mxu0 %v1113
        %v1944 = vpop.f32.mrf.mxu0
        %v1945 = vadd.f32 %v1856, %v1944
        %v1946 = vpop.f32.mrf.mxu0
        %v1947 = vadd.f32 %v1858, %v1946
        %1948 = vmatmul.bf16.gmra.mxu0 %v1114
        %v1949 = vpop.f32.mrf.mxu0
        %v1950 = vadd.f32 %v1861, %v1949
        %v1951 = vpop.f32.mrf.mxu0
        %v1952 = vadd.f32 %v1863, %v1951
        %1953 = vmatmul.bf16.gmra.mxu0 %v1115
        %v1954 = vpop.f32.mrf.mxu0
        %v1955 = vadd.f32 %v1866, %v1954
        %v1956 = vpop.f32.mrf.mxu0
        %v1957 = vadd.f32 %v1868, %v1956
        %1958 = vmatmul.bf16.gmra.mxu0 %v1116
        %v1959 = vpop.f32.mrf.mxu0
        %v1960 = vadd.f32 %v1871, %v1959
        %v1961 = vpop.f32.mrf.mxu0
        %v1962 = vadd.f32 %v1873, %v1961
        %1963 = vmatmul.bf16.gmra.mxu0 %v1117
        %v1964 = vpop.f32.mrf.mxu0
        %v1965 = vadd.f32 %v1876, %v1964
        %v1966 = vpop.f32.mrf.mxu0
        %v1967 = vadd.f32 %v1878, %v1966
        %1968 = vmatmul.bf16.gmra.mxu0 %v1118
        %v1969 = vpop.f32.mrf.mxu0
        %v1970 = vadd.f32 %v1881, %v1969
        %v1971 = vpop.f32.mrf.mxu0
        %v1972 = vadd.f32 %v1883, %v1971
        %1973 = vmatmul.bf16.gmra.mxu0 %v1119
        %v1974 = vpop.f32.mrf.mxu0
        %v1975 = vadd.f32 %v1886, %v1974
        %v1976 = vpop.f32.mrf.mxu0
        %v1977 = vadd.f32 %v1888, %v1976
        %1978 = vmatmul.bf16.gmra.mxu0 %v1120
        %v1979 = vpop.f32.mrf.mxu0
        %v1980 = vadd.f32 %v1891, %v1979
        %v1981 = vpop.f32.mrf.mxu0
        %v1982 = vadd.f32 %v1893, %v1981
        %1983 = vmatmul.bf16.gmra.mxu0 %v1121
        %v1984 = vpop.f32.mrf.mxu0
        %v1985 = vadd.f32 %v1896, %v1984
        %v1986 = vpop.f32.mrf.mxu0
        %v1987 = vadd.f32 %v1898, %v1986
        %1988 = vmatmul.bf16.gmra.mxu0 %v1122
        %v1989 = vpop.f32.mrf.mxu0
        %v1990 = vadd.f32 %v1901, %v1989
        %v1991 = vpop.f32.mrf.mxu0
        %v1992 = vadd.f32 %v1903, %v1991
        %1993 = vmatmul.bf16.gmra.mxu0 %v1123
        %v1994 = vpop.f32.mrf.mxu0
        %v1995 = vadd.f32 %v1906, %v1994
        %v1996 = vpop.f32.mrf.mxu0
        %v1997 = vadd.f32 %v1908, %v1996
        %1998 = vmatmul.bf16.gmra.mxu0 %v1124
        %v1999 = vpop.f32.mrf.mxu0
        %v2000 = vadd.f32 %v1911, %v1999
        %v2001 = vpop.f32.mrf.mxu0
        %v2002 = vadd.f32 %v1913, %v2001
        %2003 = vmatmul.bf16.gmra.mxu0 %v1125
        %v2004 = vpop.f32.mrf.mxu0
        %v2005 = vadd.f32 %v1916, %v2004
        %v2006 = vpop.f32.mrf.mxu0
        %v2007 = vadd.f32 %v1918, %v2006
        %2008 = vdwg.mxu0
        %2009 = vmatpush.bf16.msra.mxu0 %v1629
        %2010 = vmatpush.bf16.msra.mxu0 %v1628
        %2011 = vmatpush.bf16.msra.mxu0 %v1627
        %2012 = vmatpush.bf16.msra.mxu0 %v1626
        %2013 = vmatpush.bf16.msra.mxu0 %v1625
        %2014 = vmatpush.bf16.msra.mxu0 %v1624
        %2015 = vmatpush.bf16.msra.mxu0 %v1623
        %2016 = vmatpush.bf16.msra.mxu0 %v1622
        %2017 = vmatmul.bf16.gmra.mxu0 %v983
        %v2018 = vpop.f32.mrf.mxu0
        %v2019 = vadd.f32 %v1930, %v2018
        %v2020 = vpop.f32.mrf.mxu0
        %v2021 = vadd.f32 %v1932, %v2020
        %2022 = vmatmul.bf16.gmra.mxu0 %v984
        %v2023 = vpop.f32.mrf.mxu0
        %v2024 = vadd.f32 %v1935, %v2023
        %v2025 = vpop.f32.mrf.mxu0
        %v2026 = vadd.f32 %v1937, %v2025
        %2027 = vmatmul.bf16.gmra.mxu0 %v985
        %v2028 = vpop.f32.mrf.mxu0
        %v2029 = vadd.f32 %v1940, %v2028
        %v2030 = vpop.f32.mrf.mxu0
        %v2031 = vadd.f32 %v1942, %v2030
        %2032 = vmatmul.bf16.gmra.mxu0 %v986
        %v2033 = vpop.f32.mrf.mxu0
        %v2034 = vadd.f32 %v1945, %v2033
        %v2035 = vpop.f32.mrf.mxu0
        %v2036 = vadd.f32 %v1947, %v2035
        %2037 = vmatmul.bf16.gmra.mxu0 %v987
        %v2038 = vpop.f32.mrf.mxu0
        %v2039 = vadd.f32 %v1950, %v2038
        %v2040 = vpop.f32.mrf.mxu0
        %v2041 = vadd.f32 %v1952, %v2040
        %2042 = vmatmul.bf16.gmra.mxu0 %v988
        %v2043 = vpop.f32.mrf.mxu0
        %v2044 = vadd.f32 %v1955, %v2043
        %v2045 = vpop.f32.mrf.mxu0
        %v2046 = vadd.f32 %v1957, %v2045
        %2047 = vmatmul.bf16.gmra.mxu0 %v989
        %v2048 = vpop.f32.mrf.mxu0
        %v2049 = vadd.f32 %v1960, %v2048
        %v2050 = vpop.f32.mrf.mxu0
        %v2051 = vadd.f32 %v1962, %v2050
        %2052 = vmatmul.bf16.gmra.mxu0 %v990
        %v2053 = vpop.f32.mrf.mxu0
        %v2054 = vadd.f32 %v1965, %v2053
        %v2055 = vpop.f32.mrf.mxu0
        %v2056 = vadd.f32 %v1967, %v2055
        %2057 = vmatmul.bf16.gmra.mxu0 %v991
        %v2058 = vpop.f32.mrf.mxu0
        %v2059 = vadd.f32 %v1970, %v2058
        %v2060 = vpop.f32.mrf.mxu0
        %v2061 = vadd.f32 %v1972, %v2060
        %2062 = vmatmul.bf16.gmra.mxu0 %v992
        %v2063 = vpop.f32.mrf.mxu0
        %v2064 = vadd.f32 %v1975, %v2063
        %v2065 = vpop.f32.mrf.mxu0
        %v2066 = vadd.f32 %v1977, %v2065
        %2067 = vmatmul.bf16.gmra.mxu0 %v993
        %v2068 = vpop.f32.mrf.mxu0
        %v2069 = vadd.f32 %v1980, %v2068
        %v2070 = vpop.f32.mrf.mxu0
        %v2071 = vadd.f32 %v1982, %v2070
        %2072 = vmatmul.bf16.gmra.mxu0 %v994
        %v2073 = vpop.f32.mrf.mxu0
        %v2074 = vadd.f32 %v1985, %v2073
        %v2075 = vpop.f32.mrf.mxu0
        %v2076 = vadd.f32 %v1987, %v2075
        %2077 = vmatmul.bf16.gmra.mxu0 %v995
        %v2078 = vpop.f32.mrf.mxu0
        %v2079 = vadd.f32 %v1990, %v2078
        %v2080 = vpop.f32.mrf.mxu0
        %v2081 = vadd.f32 %v1992, %v2080
        %2082 = vmatmul.bf16.gmra.mxu0 %v996
        %v2083 = vpop.f32.mrf.mxu0
        %v2084 = vadd.f32 %v1995, %v2083
        %v2085 = vpop.f32.mrf.mxu0
        %v2086 = vadd.f32 %v1997, %v2085
        %2087 = vmatmul.bf16.gmra.mxu0 %v997
        %v2088 = vpop.f32.mrf.mxu0
        %v2089 = vadd.f32 %v2000, %v2088
        %v2090 = vpop.f32.mrf.mxu0
        %v2091 = vadd.f32 %v2002, %v2090
        %2092 = vmatmul.bf16.gmra.mxu0 %v1144
        %v2093 = vpop.f32.mrf.mxu0
        %v2094 = vadd.f32 %v2005, %v2093
        %v2095 = vpop.f32.mrf.mxu0
        %v2096 = vadd.f32 %v2007, %v2095
        %2097 = vdwg.mxu0
        %2098 = vmatpush.bf16.msra.mxu0 %v1637
        %2099 = vmatpush.bf16.msra.mxu0 %v1636
        %2100 = vmatpush.bf16.msra.mxu0 %v1635
        %2101 = vmatpush.bf16.msra.mxu0 %v1634
        %2102 = vmatpush.bf16.msra.mxu0 %v1633
        %2103 = vmatpush.bf16.msra.mxu0 %v1632
        %2104 = vmatpush.bf16.msra.mxu0 %v1631
        %2105 = vmatpush.bf16.msra.mxu0 %v1630
        %2106 = vmatmul.bf16.gmra.mxu0 %v1047
        %v2107 = vpop.f32.mrf.mxu0
        %v2108 = vadd.f32 %v2019, %v2107
        %v2109 = vpop.f32.mrf.mxu0
        %v2110 = vadd.f32 %v2021, %v2109
        %2111 = vmatmul.bf16.gmra.mxu0 %v1048
        %v2112 = vpop.f32.mrf.mxu0
        %v2113 = vadd.f32 %v2024, %v2112
        %v2114 = vpop.f32.mrf.mxu0
        %v2115 = vadd.f32 %v2026, %v2114
        %2116 = vmatmul.bf16.gmra.mxu0 %v1049
        %v2117 = vpop.f32.mrf.mxu0
        %v2118 = vadd.f32 %v2029, %v2117
        %v2119 = vpop.f32.mrf.mxu0
        %v2120 = vadd.f32 %v2031, %v2119
        %2121 = vmatmul.bf16.gmra.mxu0 %v1050
        %v2122 = vpop.f32.mrf.mxu0
        %v2123 = vadd.f32 %v2034, %v2122
        %v2124 = vpop.f32.mrf.mxu0
        %v2125 = vadd.f32 %v2036, %v2124
        %2126 = vmatmul.bf16.gmra.mxu0 %v1051
        %v2127 = vpop.f32.mrf.mxu0
        %v2128 = vadd.f32 %v2039, %v2127
        %v2129 = vpop.f32.mrf.mxu0
        %v2130 = vadd.f32 %v2041, %v2129
        %2131 = vmatmul.bf16.gmra.mxu0 %v1052
        %v2132 = vpop.f32.mrf.mxu0
        %v2133 = vadd.f32 %v2044, %v2132
        %v2134 = vpop.f32.mrf.mxu0
        %v2135 = vadd.f32 %v2046, %v2134
        %2136 = vmatmul.bf16.gmra.mxu0 %v1053
        %v2137 = vpop.f32.mrf.mxu0
        %v2138 = vadd.f32 %v2049, %v2137
        %v2139 = vpop.f32.mrf.mxu0
        %v2140 = vadd.f32 %v2051, %v2139
        %2141 = vmatmul.bf16.gmra.mxu0 %v1054
        %v2142 = vpop.f32.mrf.mxu0
        %v2143 = vadd.f32 %v2054, %v2142
        %v2144 = vpop.f32.mrf.mxu0
        %v2145 = vadd.f32 %v2056, %v2144
        %2146 = vmatmul.bf16.gmra.mxu0 %v1055
        %v2147 = vpop.f32.mrf.mxu0
        %v2148 = vadd.f32 %v2059, %v2147
        %v2149 = vpop.f32.mrf.mxu0
        %v2150 = vadd.f32 %v2061, %v2149
        %2151 = vmatmul.bf16.gmra.mxu0 %v1056
        %v2152 = vpop.f32.mrf.mxu0
        %v2153 = vadd.f32 %v2064, %v2152
        %v2154 = vpop.f32.mrf.mxu0
        %v2155 = vadd.f32 %v2066, %v2154
        %2156 = vmatmul.bf16.gmra.mxu0 %v1057
        %v2157 = vpop.f32.mrf.mxu0
        %v2158 = vadd.f32 %v2069, %v2157
        %v2159 = vpop.f32.mrf.mxu0
        %v2160 = vadd.f32 %v2071, %v2159
        %2161 = vmatmul.bf16.gmra.mxu0 %v1058
        %v2162 = vpop.f32.mrf.mxu0
        %v2163 = vadd.f32 %v2074, %v2162
        %v2164 = vpop.f32.mrf.mxu0
        %v2165 = vadd.f32 %v2076, %v2164
        %2166 = vmatmul.bf16.gmra.mxu0 %v1059
        %v2167 = vpop.f32.mrf.mxu0
        %v2168 = vadd.f32 %v2079, %v2167
        %v2169 = vpop.f32.mrf.mxu0
        %v2170 = vadd.f32 %v2081, %v2169
        %2171 = vmatmul.bf16.gmra.mxu0 %v1060
        %v2172 = vpop.f32.mrf.mxu0
        %v2173 = vadd.f32 %v2084, %v2172
        %v2174 = vpop.f32.mrf.mxu0
        %v2175 = vadd.f32 %v2086, %v2174
        %2176 = vmatmul.bf16.gmra.mxu0 %v1061
        %v2177 = vpop.f32.mrf.mxu0
        %v2178 = vadd.f32 %v2089, %v2177
        %v2179 = vpop.f32.mrf.mxu0
        %v2180 = vadd.f32 %v2091, %v2179
        %2181 = vmatmul.bf16.gmra.mxu0 %v1148
        %v2182 = vpop.f32.mrf.mxu0
        %v2183 = vadd.f32 %v2094, %v2182
        %v2184 = vpop.f32.mrf.mxu0
        %v2185 = vadd.f32 %v2096, %v2184
        %2186 = vdwg.mxu0
        %2187 = vmatpush.bf16.msra.mxu0 %v1645
        %2188 = vmatpush.bf16.msra.mxu0 %v1644
        %2189 = vmatpush.bf16.msra.mxu0 %v1643
        %2190 = vmatpush.bf16.msra.mxu0 %v1642
        %2191 = vmatpush.bf16.msra.mxu0 %v1641
        %2192 = vmatpush.bf16.msra.mxu0 %v1640
        %2193 = vmatpush.bf16.msra.mxu0 %v1639
        %2194 = vmatpush.bf16.msra.mxu0 %v1638
        %2195 = vmatmul.bf16.gmra.mxu0 %v1111
        %v2196 = vpop.f32.mrf.mxu0
        %v2197 = vadd.f32 %v2108, %v2196
        %v2198 = vpop.f32.mrf.mxu0
        %v2199 = vadd.f32 %v2110, %v2198
        %2200 = vmatmul.bf16.gmra.mxu0 %v1112
        %v2201 = vpop.f32.mrf.mxu0
        %v2202 = vadd.f32 %v2113, %v2201
        %v2203 = vpop.f32.mrf.mxu0
        %v2204 = vadd.f32 %v2115, %v2203
        %2205 = vmatmul.bf16.gmra.mxu0 %v1113
        %v2206 = vpop.f32.mrf.mxu0
        %v2207 = vadd.f32 %v2118, %v2206
        %v2208 = vpop.f32.mrf.mxu0
        %v2209 = vadd.f32 %v2120, %v2208
        %2210 = vmatmul.bf16.gmra.mxu0 %v1114
        %v2211 = vpop.f32.mrf.mxu0
        %v2212 = vadd.f32 %v2123, %v2211
        %v2213 = vpop.f32.mrf.mxu0
        %v2214 = vadd.f32 %v2125, %v2213
        %2215 = vmatmul.bf16.gmra.mxu0 %v1115
        %v2216 = vpop.f32.mrf.mxu0
        %v2217 = vadd.f32 %v2128, %v2216
        %v2218 = vpop.f32.mrf.mxu0
        %v2219 = vadd.f32 %v2130, %v2218
        %2220 = vmatmul.bf16.gmra.mxu0 %v1116
        %v2221 = vpop.f32.mrf.mxu0
        %v2222 = vadd.f32 %v2133, %v2221
        %v2223 = vpop.f32.mrf.mxu0
        %v2224 = vadd.f32 %v2135, %v2223
        %2225 = vmatmul.bf16.gmra.mxu0 %v1117
        %v2226 = vpop.f32.mrf.mxu0
        %v2227 = vadd.f32 %v2138, %v2226
        %v2228 = vpop.f32.mrf.mxu0
        %v2229 = vadd.f32 %v2140, %v2228
        %2230 = vmatmul.bf16.gmra.mxu0 %v1118
        %v2231 = vpop.f32.mrf.mxu0
        %v2232 = vadd.f32 %v2143, %v2231
        %v2233 = vpop.f32.mrf.mxu0
        %v2234 = vadd.f32 %v2145, %v2233
        %2235 = vmatmul.bf16.gmra.mxu0 %v1119
        %v2236 = vpop.f32.mrf.mxu0
        %v2237 = vadd.f32 %v2148, %v2236
        %v2238 = vpop.f32.mrf.mxu0
        %v2239 = vadd.f32 %v2150, %v2238
        %2240 = vmatmul.bf16.gmra.mxu0 %v1120
        %v2241 = vpop.f32.mrf.mxu0
        %v2242 = vadd.f32 %v2153, %v2241
        %v2243 = vpop.f32.mrf.mxu0
        %v2244 = vadd.f32 %v2155, %v2243
        %2245 = vmatmul.bf16.gmra.mxu0 %v1121
        %v2246 = vpop.f32.mrf.mxu0
        %v2247 = vadd.f32 %v2158, %v2246
        %v2248 = vpop.f32.mrf.mxu0
        %v2249 = vadd.f32 %v2160, %v2248
        %2250 = vmatmul.bf16.gmra.mxu0 %v1122
        %v2251 = vpop.f32.mrf.mxu0
        %v2252 = vadd.f32 %v2163, %v2251
        %v2253 = vpop.f32.mrf.mxu0
        %v2254 = vadd.f32 %v2165, %v2253
        %2255 = vmatmul.bf16.gmra.mxu0 %v1123
        %v2256 = vpop.f32.mrf.mxu0
        %v2257 = vadd.f32 %v2168, %v2256
        %v2258 = vpop.f32.mrf.mxu0
        %v2259 = vadd.f32 %v2170, %v2258
        %2260 = vmatmul.bf16.gmra.mxu0 %v1124
        %v2261 = vpop.f32.mrf.mxu0
        %v2262 = vadd.f32 %v2173, %v2261
        %v2263 = vpop.f32.mrf.mxu0
        %v2264 = vadd.f32 %v2175, %v2263
        %2265 = vmatmul.bf16.gmra.mxu0 %v1125
        %v2266 = vpop.f32.mrf.mxu0
        %v2267 = vadd.f32 %v2178, %v2266
        %v2268 = vpop.f32.mrf.mxu0
        %v2269 = vadd.f32 %v2180, %v2268
        %2270 = vmatmul.bf16.gmra.mxu0 %v1152
        %v2271 = vpop.f32.mrf.mxu0
        %v2272 = vadd.f32 %v2183, %v2271
        %v2273 = vpop.f32.mrf.mxu0
        %v2274 = vadd.f32 %v2185, %v2273
        %2275 = vdwg.mxu0
        %2276 = vmatpush.bf16.msra.mxu0 %v1653
        %2277 = vmatpush.bf16.msra.mxu0 %v1652
        %2278 = vmatpush.bf16.msra.mxu0 %v1651
        %2279 = vmatpush.bf16.msra.mxu0 %v1650
        %2280 = vmatpush.bf16.msra.mxu0 %v1649
        %2281 = vmatpush.bf16.msra.mxu0 %v1648
        %2282 = vmatpush.bf16.msra.mxu0 %v1647
        %2283 = vmatpush.bf16.msra.mxu0 %v1646
        %2284 = vmatmul.bf16.gmra.mxu0 %v984
        %v2285 = vpop.f32.mrf.mxu0
        %v2286 = vadd.f32 %v2197, %v2285
        %v2287 = vpop.f32.mrf.mxu0
        %v2288 = vadd.f32 %v2199, %v2287
        %2289 = vmatmul.bf16.gmra.mxu0 %v985
        %v2290 = vpop.f32.mrf.mxu0
        %v2291 = vadd.f32 %v2202, %v2290
        %v2292 = vpop.f32.mrf.mxu0
        %v2293 = vadd.f32 %v2204, %v2292
        %2294 = vmatmul.bf16.gmra.mxu0 %v986
        %v2295 = vpop.f32.mrf.mxu0
        %v2296 = vadd.f32 %v2207, %v2295
        %v2297 = vpop.f32.mrf.mxu0
        %v2298 = vadd.f32 %v2209, %v2297
        %2299 = vmatmul.bf16.gmra.mxu0 %v987
        %v2300 = vpop.f32.mrf.mxu0
        %v2301 = vadd.f32 %v2212, %v2300
        %v2302 = vpop.f32.mrf.mxu0
        %v2303 = vadd.f32 %v2214, %v2302
        %2304 = vmatmul.bf16.gmra.mxu0 %v988
        %v2305 = vpop.f32.mrf.mxu0
        %v2306 = vadd.f32 %v2217, %v2305
        %v2307 = vpop.f32.mrf.mxu0
        %v2308 = vadd.f32 %v2219, %v2307
        %2309 = vmatmul.bf16.gmra.mxu0 %v989
        %v2310 = vpop.f32.mrf.mxu0
        %v2311 = vadd.f32 %v2222, %v2310
        %v2312 = vpop.f32.mrf.mxu0
        %v2313 = vadd.f32 %v2224, %v2312
        %2314 = vmatmul.bf16.gmra.mxu0 %v990
        %v2315 = vpop.f32.mrf.mxu0
        %v2316 = vadd.f32 %v2227, %v2315
        %v2317 = vpop.f32.mrf.mxu0
        %v2318 = vadd.f32 %v2229, %v2317
        %2319 = vmatmul.bf16.gmra.mxu0 %v991
        %v2320 = vpop.f32.mrf.mxu0
        %v2321 = vadd.f32 %v2232, %v2320
        %v2322 = vpop.f32.mrf.mxu0
        %v2323 = vadd.f32 %v2234, %v2322
        %2324 = vmatmul.bf16.gmra.mxu0 %v992
        %v2325 = vpop.f32.mrf.mxu0
        %v2326 = vadd.f32 %v2237, %v2325
        %v2327 = vpop.f32.mrf.mxu0
        %v2328 = vadd.f32 %v2239, %v2327
        %2329 = vmatmul.bf16.gmra.mxu0 %v993
        %v2330 = vpop.f32.mrf.mxu0
        %v2331 = vadd.f32 %v2242, %v2330
        %v2332 = vpop.f32.mrf.mxu0
        %v2333 = vadd.f32 %v2244, %v2332
        %2334 = vmatmul.bf16.gmra.mxu0 %v994
        %v2335 = vpop.f32.mrf.mxu0
        %v2336 = vadd.f32 %v2247, %v2335
        %v2337 = vpop.f32.mrf.mxu0
        %v2338 = vadd.f32 %v2249, %v2337
        %2339 = vmatmul.bf16.gmra.mxu0 %v995
        %v2340 = vpop.f32.mrf.mxu0
        %v2341 = vadd.f32 %v2252, %v2340
        %v2342 = vpop.f32.mrf.mxu0
        %v2343 = vadd.f32 %v2254, %v2342
        %2344 = vmatmul.bf16.gmra.mxu0 %v996
        %v2345 = vpop.f32.mrf.mxu0
        %v2346 = vadd.f32 %v2257, %v2345
        %v2347 = vpop.f32.mrf.mxu0
        %v2348 = vadd.f32 %v2259, %v2347
        %2349 = vmatmul.bf16.gmra.mxu0 %v997
        %v2350 = vpop.f32.mrf.mxu0
        %v2351 = vadd.f32 %v2262, %v2350
        %v2352 = vpop.f32.mrf.mxu0
        %v2353 = vadd.f32 %v2264, %v2352
        %2354 = vmatmul.bf16.gmra.mxu0 %v1144
        %v2355 = vpop.f32.mrf.mxu0
        %v2356 = vadd.f32 %v2267, %v2355
        %v2357 = vpop.f32.mrf.mxu0
        %v2358 = vadd.f32 %v2269, %v2357
        %2359 = vmatmul.bf16.gmra.mxu0 %v1156
        %v2360 = vpop.f32.mrf.mxu0
        %v2361 = vadd.f32 %v2272, %v2360
        %v2362 = vpop.f32.mrf.mxu0
        %v2363 = vadd.f32 %v2274, %v2362
        %2364 = vdwg.mxu0
        %2365 = vmatpush.bf16.msra.mxu0 %v1661
        %2366 = vmatpush.bf16.msra.mxu0 %v1660
        %2367 = vmatpush.bf16.msra.mxu0 %v1659
        %2368 = vmatpush.bf16.msra.mxu0 %v1658
        %2369 = vmatpush.bf16.msra.mxu0 %v1657
        %2370 = vmatpush.bf16.msra.mxu0 %v1656
        %2371 = vmatpush.bf16.msra.mxu0 %v1655
        %2372 = vmatpush.bf16.msra.mxu0 %v1654
        %2373 = vmatmul.bf16.gmra.mxu0 %v1048
        %v2374 = vpop.f32.mrf.mxu0
        %v2375 = vadd.f32 %v2286, %v2374
        %v2376 = vpop.f32.mrf.mxu0
        %v2377 = vadd.f32 %v2288, %v2376
        %2378 = vmatmul.bf16.gmra.mxu0 %v1049
        %v2379 = vpop.f32.mrf.mxu0
        %v2380 = vadd.f32 %v2291, %v2379
        %v2381 = vpop.f32.mrf.mxu0
        %v2382 = vadd.f32 %v2293, %v2381
        %2383 = vmatmul.bf16.gmra.mxu0 %v1050
        %v2384 = vpop.f32.mrf.mxu0
        %v2385 = vadd.f32 %v2296, %v2384
        %v2386 = vpop.f32.mrf.mxu0
        %v2387 = vadd.f32 %v2298, %v2386
        %2388 = vmatmul.bf16.gmra.mxu0 %v1051
        %v2389 = vpop.f32.mrf.mxu0
        %v2390 = vadd.f32 %v2301, %v2389
        %v2391 = vpop.f32.mrf.mxu0
        %v2392 = vadd.f32 %v2303, %v2391
        %2393 = vmatmul.bf16.gmra.mxu0 %v1052
        %v2394 = vpop.f32.mrf.mxu0
        %v2395 = vadd.f32 %v2306, %v2394
        %v2396 = vpop.f32.mrf.mxu0
        %v2397 = vadd.f32 %v2308, %v2396
        %2398 = vmatmul.bf16.gmra.mxu0 %v1053
        %v2399 = vpop.f32.mrf.mxu0
        %v2400 = vadd.f32 %v2311, %v2399
        %v2401 = vpop.f32.mrf.mxu0
        %v2402 = vadd.f32 %v2313, %v2401
        %2403 = vmatmul.bf16.gmra.mxu0 %v1054
        %v2404 = vpop.f32.mrf.mxu0
        %v2405 = vadd.f32 %v2316, %v2404
        %v2406 = vpop.f32.mrf.mxu0
        %v2407 = vadd.f32 %v2318, %v2406
        %2408 = vmatmul.bf16.gmra.mxu0 %v1055
        %v2409 = vpop.f32.mrf.mxu0
        %v2410 = vadd.f32 %v2321, %v2409
        %v2411 = vpop.f32.mrf.mxu0
        %v2412 = vadd.f32 %v2323, %v2411
        %2413 = vmatmul.bf16.gmra.mxu0 %v1056
        %v2414 = vpop.f32.mrf.mxu0
        %v2415 = vadd.f32 %v2326, %v2414
        %v2416 = vpop.f32.mrf.mxu0
        %v2417 = vadd.f32 %v2328, %v2416
        %2418 = vmatmul.bf16.gmra.mxu0 %v1057
        %v2419 = vpop.f32.mrf.mxu0
        %v2420 = vadd.f32 %v2331, %v2419
        %v2421 = vpop.f32.mrf.mxu0
        %v2422 = vadd.f32 %v2333, %v2421
        %2423 = vmatmul.bf16.gmra.mxu0 %v1058
        %v2424 = vpop.f32.mrf.mxu0
        %v2425 = vadd.f32 %v2336, %v2424
        %v2426 = vpop.f32.mrf.mxu0
        %v2427 = vadd.f32 %v2338, %v2426
        %2428 = vmatmul.bf16.gmra.mxu0 %v1059
        %v2429 = vpop.f32.mrf.mxu0
        %v2430 = vadd.f32 %v2341, %v2429
        %v2431 = vpop.f32.mrf.mxu0
        %v2432 = vadd.f32 %v2343, %v2431
        %2433 = vmatmul.bf16.gmra.mxu0 %v1060
        %v2434 = vpop.f32.mrf.mxu0
        %v2435 = vadd.f32 %v2346, %v2434
        %v2436 = vpop.f32.mrf.mxu0
        %v2437 = vadd.f32 %v2348, %v2436
        %2438 = vmatmul.bf16.gmra.mxu0 %v1061
        %v2439 = vpop.f32.mrf.mxu0
        %v2440 = vadd.f32 %v2351, %v2439
        %v2441 = vpop.f32.mrf.mxu0
        %v2442 = vadd.f32 %v2353, %v2441
        %2443 = vmatmul.bf16.gmra.mxu0 %v1148
        %v2444 = vpop.f32.mrf.mxu0
        %v2445 = vadd.f32 %v2356, %v2444
        %v2446 = vpop.f32.mrf.mxu0
        %v2447 = vadd.f32 %v2358, %v2446
        %2448 = vmatmul.bf16.gmra.mxu0 %v1160
        %v2449 = vpop.f32.mrf.mxu0
        %v2450 = vadd.f32 %v2361, %v2449
        %v2451 = vpop.f32.mrf.mxu0
        %v2452 = vadd.f32 %v2363, %v2451
        %2453 = vdwg.mxu0
        %2454 = vmatpush.bf16.msra.mxu0 %v1669
        %2455 = vmatpush.bf16.msra.mxu0 %v1668
        %2456 = vmatpush.bf16.msra.mxu0 %v1667
        %2457 = vmatpush.bf16.msra.mxu0 %v1666
        %2458 = vmatpush.bf16.msra.mxu0 %v1665
        %2459 = vmatpush.bf16.msra.mxu0 %v1664
        %2460 = vmatpush.bf16.msra.mxu0 %v1663
        %2461 = vmatpush.bf16.msra.mxu0 %v1662
        %2462 = vmatmul.bf16.gmra.mxu0 %v1112
        %v2463 = vpop.f32.mrf.mxu0
        %v2464 = vadd.f32 %v2375, %v2463
        %v2465 = vpop.f32.mrf.mxu0
        %v2466 = vadd.f32 %v2377, %v2465
        %2467 = vmatmul.bf16.gmra.mxu0 %v1113
        %v2468 = vpop.f32.mrf.mxu0
        %v2469 = vadd.f32 %v2380, %v2468
        %v2470 = vpop.f32.mrf.mxu0
        %v2471 = vadd.f32 %v2382, %v2470
        %2472 = vmatmul.bf16.gmra.mxu0 %v1114
        %v2473 = vpop.f32.mrf.mxu0
        %v2474 = vadd.f32 %v2385, %v2473
        %v2475 = vpop.f32.mrf.mxu0
        %v2476 = vadd.f32 %v2387, %v2475
        %2477 = vmatmul.bf16.gmra.mxu0 %v1115
        %v2478 = vpop.f32.mrf.mxu0
        %v2479 = vadd.f32 %v2390, %v2478
        %v2480 = vpop.f32.mrf.mxu0
        %v2481 = vadd.f32 %v2392, %v2480
        %2482 = vmatmul.bf16.gmra.mxu0 %v1116
        %v2483 = vpop.f32.mrf.mxu0
        %v2484 = vadd.f32 %v2395, %v2483
        %v2485 = vpop.f32.mrf.mxu0
        %v2486 = vadd.f32 %v2397, %v2485
        %2487 = vmatmul.bf16.gmra.mxu0 %v1117
        %v2488 = vpop.f32.mrf.mxu0
        %v2489 = vadd.f32 %v2400, %v2488
        %v2490 = vpop.f32.mrf.mxu0
        %v2491 = vadd.f32 %v2402, %v2490
        %2492 = vmatmul.bf16.gmra.mxu0 %v1118
        %v2493 = vpop.f32.mrf.mxu0
        %v2494 = vadd.f32 %v2405, %v2493
        %v2495 = vpop.f32.mrf.mxu0
        %v2496 = vadd.f32 %v2407, %v2495
        %2497 = vmatmul.bf16.gmra.mxu0 %v1119
        %v2498 = vpop.f32.mrf.mxu0
        %v2499 = vadd.f32 %v2410, %v2498
        %v2500 = vpop.f32.mrf.mxu0
        %v2501 = vadd.f32 %v2412, %v2500
        %2502 = vmatmul.bf16.gmra.mxu0 %v1120
        %v2503 = vpop.f32.mrf.mxu0
        %v2504 = vadd.f32 %v2415, %v2503
        %v2505 = vpop.f32.mrf.mxu0
        %v2506 = vadd.f32 %v2417, %v2505
        %2507 = vmatmul.bf16.gmra.mxu0 %v1121
        %v2508 = vpop.f32.mrf.mxu0
        %v2509 = vadd.f32 %v2420, %v2508
        %v2510 = vpop.f32.mrf.mxu0
        %v2511 = vadd.f32 %v2422, %v2510
        %2512 = vmatmul.bf16.gmra.mxu0 %v1122
        %v2513 = vpop.f32.mrf.mxu0
        %v2514 = vadd.f32 %v2425, %v2513
        %v2515 = vpop.f32.mrf.mxu0
        %v2516 = vadd.f32 %v2427, %v2515
        %2517 = vmatmul.bf16.gmra.mxu0 %v1123
        %v2518 = vpop.f32.mrf.mxu0
        %v2519 = vadd.f32 %v2430, %v2518
        %v2520 = vpop.f32.mrf.mxu0
        %v2521 = vadd.f32 %v2432, %v2520
        %2522 = vmatmul.bf16.gmra.mxu0 %v1124
        %v2523 = vpop.f32.mrf.mxu0
        %v2524 = vadd.f32 %v2435, %v2523
        %v2525 = vpop.f32.mrf.mxu0
        %v2526 = vadd.f32 %v2437, %v2525
        %2527 = vmatmul.bf16.gmra.mxu0 %v1125
        %v2528 = vpop.f32.mrf.mxu0
        %v2529 = vadd.f32 %v2440, %v2528
        %v2530 = vpop.f32.mrf.mxu0
        %v2531 = vadd.f32 %v2442, %v2530
        %2532 = vmatmul.bf16.gmra.mxu0 %v1152
        %v2533 = vpop.f32.mrf.mxu0
        %v2534 = vadd.f32 %v2445, %v2533
        %v2535 = vpop.f32.mrf.mxu0
        %v2536 = vadd.f32 %v2447, %v2535
        %2537 = vmatmul.bf16.gmra.mxu0 %v1164
        %v2538 = vpop.f32.mrf.mxu0
        %v2539 = vadd.f32 %v2450, %v2538
        %v2540 = vpop.f32.mrf.mxu0
        %v2541 = vadd.f32 %v2452, %v2540
        %2542 = vdwg.mxu0
        %v2543 = vadd.f32 %v2464, %v2466
        %v2544 = vadd.f32 %v2543, %v2469
        %v2545 = vadd.f32 %v2544, %v2471
        %v2546 = vadd.f32 %v2545, %v2474
        %v2547 = vadd.f32 %v2546, %v2476
        %v2548 = vadd.f32 %v2547, %v2479
        %v2549 = vadd.f32 %v2548, %v2481
        %v2550 = vadd.f32 %v2549, %v2484
        %v2551 = vadd.f32 %v2550, %v2486
        %v2552 = vadd.f32 %v2551, %v2489
        %v2553 = vadd.f32 %v2552, %v2491
        %v2554 = vadd.f32 %v2553, %v2494
        %v2555 = vadd.f32 %v2554, %v2496
        %v2556 = vadd.f32 %v2555, %v2499
        %v2557 = vadd.f32 %v2556, %v2501
        %v2558 = vadd.f32 %v2557, %v2504
        %v2559 = vadd.f32 %v2558, %v2506
        %v2560 = vadd.f32 %v2559, %v2509
        %v2561 = vadd.f32 %v2560, %v2511
        %v2562 = vadd.f32 %v2561, %v2514
        %v2563 = vadd.f32 %v2562, %v2516
        %v2564 = vadd.f32 %v2563, %v2519
        %v2565 = vadd.f32 %v2564, %v2521
        %v2566 = vadd.f32 %v2565, %v2524
        %v2567 = vadd.f32 %v2566, %v2526
        %v2568 = vadd.f32 %v2567, %v2529
        %v2569 = vadd.f32 %v2568, %v2531
        %v2570 = vadd.f32 %v2569, %v2534
        %v2571 = vadd.f32 %v2570, %v2536
        %v2572 = vadd.f32 %v2571, %v2539
        %v2573 = vadd.f32 %v2572, %v2541
        %v2574 = vrot.slane %v2573, 4
        %v2575 = vadd.f32 %v2573, %v2574
        %v2576 = vrot.slane %v2575, 2
        %v2577 = vadd.f32 %v2575, %v2576
        %v2578 = vrot.slane %v2577, 1
        %v2579 = vadd.f32 %v2577, %v2578
        %v2580 = vmul.f32 %v2464, %v2464
        %v2581 = vmul.f32 %v2466, %v2466
        %v2582 = vmul.f32 %v2469, %v2469
        %v2583 = vmul.f32 %v2471, %v2471
        %v2584 = vmul.f32 %v2474, %v2474
        %v2585 = vmul.f32 %v2476, %v2476
        %v2586 = vmul.f32 %v2479, %v2479
        %v2587 = vmul.f32 %v2481, %v2481
        %v2588 = vmul.f32 %v2484, %v2484
        %v2589 = vmul.f32 %v2486, %v2486
        %v2590 = vmul.f32 %v2489, %v2489
        %v2591 = vmul.f32 %v2491, %v2491
        %v2592 = vmul.f32 %v2494, %v2494
        %v2593 = vmul.f32 %v2496, %v2496
        %v2594 = vmul.f32 %v2499, %v2499
        %v2595 = vmul.f32 %v2501, %v2501
        %v2596 = vmul.f32 %v2504, %v2504
        %v2597 = vmul.f32 %v2506, %v2506
        %v2598 = vmul.f32 %v2509, %v2509
        %v2599 = vmul.f32 %v2511, %v2511
        %v2600 = vmul.f32 %v2514, %v2514
        %v2601 = vmul.f32 %v2516, %v2516
        %v2602 = vmul.f32 %v2519, %v2519
        %v2603 = vmul.f32 %v2521, %v2521
        %v2604 = vmul.f32 %v2524, %v2524
        %v2605 = vmul.f32 %v2526, %v2526
        %v2606 = vmul.f32 %v2529, %v2529
        %v2607 = vmul.f32 %v2531, %v2531
        %v2608 = vmul.f32 %v2534, %v2534
        %v2609 = vmul.f32 %v2536, %v2536
        %v2610 = vmul.f32 %v2539, %v2539
        %v2611 = vmul.f32 %v2541, %v2541
        %v2612 = vadd.f32 %v2580, %v2581
        %v2613 = vadd.f32 %v2612, %v2582
        %v2614 = vadd.f32 %v2613, %v2583
        %v2615 = vadd.f32 %v2614, %v2584
        %v2616 = vadd.f32 %v2615, %v2585
        %v2617 = vadd.f32 %v2616, %v2586
        %v2618 = vadd.f32 %v2617, %v2587
        %v2619 = vadd.f32 %v2618, %v2588
        %v2620 = vadd.f32 %v2619, %v2589
        %v2621 = vadd.f32 %v2620, %v2590
        %v2622 = vadd.f32 %v2621, %v2591
        %v2623 = vadd.f32 %v2622, %v2592
        %v2624 = vadd.f32 %v2623, %v2593
        %v2625 = vadd.f32 %v2624, %v2594
        %v2626 = vadd.f32 %v2625, %v2595
        %v2627 = vadd.f32 %v2626, %v2596
        %v2628 = vadd.f32 %v2627, %v2597
        %v2629 = vadd.f32 %v2628, %v2598
        %v2630 = vadd.f32 %v2629, %v2599
        %v2631 = vadd.f32 %v2630, %v2600
        %v2632 = vadd.f32 %v2631, %v2601
        %v2633 = vadd.f32 %v2632, %v2602
        %v2634 = vadd.f32 %v2633, %v2603
        %v2635 = vadd.f32 %v2634, %v2604
        %v2636 = vadd.f32 %v2635, %v2605
        %v2637 = vadd.f32 %v2636, %v2606
        %v2638 = vadd.f32 %v2637, %v2607
        %v2639 = vadd.f32 %v2638, %v2608
        %v2640 = vadd.f32 %v2639, %v2609
        %v2641 = vadd.f32 %v2640, %v2610
        %v2642 = vadd.f32 %v2641, %v2611
        %v2643 = vrot.slane %v2642, 4
        %v2644 = vadd.f32 %v2642, %v2643
        %v2645 = vrot.slane %v2644, 2
        %v2646 = vadd.f32 %v2644, %v2645
        %v2647 = vrot.slane %v2646, 1
        %v2648 = vadd.f32 %v2646, %v2647
        %vm2649 = vcmask 1040384
        %v2650 = vsel %vm2649, %v2579, %v2648
        %2651 = vst [vmem:[%s265] sm:$0x3] %v2650
        %v2652 = vpack.c.bf16 %v2464, %v2464
        %v2653 = vpack.c.bf16 %v2466, %v2466
        %v2654 = vpack.c.bf16 %v2469, %v2469
        %v2655 = vpack.c.bf16 %v2471, %v2471
        %v2656 = vpack.c.bf16 %v2474, %v2474
        %v2657 = vpack.c.bf16 %v2476, %v2476
        %v2658 = vpack.c.bf16 %v2479, %v2479
        %v2659 = vpack.c.bf16 %v2481, %v2481
        %v2660 = vpack.c.bf16 %v2484, %v2484
        %v2661 = vpack.c.bf16 %v2486, %v2486
        %v2662 = vpack.c.bf16 %v2489, %v2489
        %v2663 = vpack.c.bf16 %v2491, %v2491
        %v2664 = vpack.c.bf16 %v2494, %v2494
        %v2665 = vpack.c.bf16 %v2496, %v2496
        %v2666 = vpack.c.bf16 %v2499, %v2499
        %v2667 = vpack.c.bf16 %v2501, %v2501
        %v2668 = vpack.c.bf16 %v2504, %v2504
        %v2669 = vpack.c.bf16 %v2506, %v2506
        %v2670 = vpack.c.bf16 %v2509, %v2509
        %v2671 = vpack.c.bf16 %v2511, %v2511
        %v2672 = vpack.c.bf16 %v2514, %v2514
        %v2673 = vpack.c.bf16 %v2516, %v2516
        %v2674 = vpack.c.bf16 %v2519, %v2519
        %v2675 = vpack.c.bf16 %v2521, %v2521
        %v2676 = vpack.c.bf16 %v2524, %v2524
        %v2677 = vpack.c.bf16 %v2526, %v2526
        %v2678 = vpack.c.bf16 %v2529, %v2529
        %v2679 = vpack.c.bf16 %v2531, %v2531
        %v2680 = vpack.c.bf16 %v2534, %v2534
        %v2681 = vpack.c.bf16 %v2536, %v2536
        %v2682 = vpack.c.bf16 %v2539, %v2539
        %v2683 = vpack.c.bf16 %v2541, %v2541
        %2684 = vst [vmem:[%s251] sm:$0xf] %v2652
        %2685 = vst [vmem:[%s251 + $0x4] sm:$0xf] %v2653
        %2686 = vst [vmem:[%s251 + $0x8] sm:$0xf] %v2654
        %2687 = vst [vmem:[%s251 + $0xc] sm:$0xf] %v2655
        %2688 = vst [vmem:[%s251 + $0x10] sm:$0xf] %v2656
        %2689 = vst [vmem:[%s251 + $0x14] sm:$0xf] %v2657
        %2690 = vst [vmem:[%s251 + $0x18] sm:$0xf] %v2658
        %2691 = vst [vmem:[%s251 + $0x1c] sm:$0xf] %v2659
        %2692 = vst [vmem:[%s251 + $0x20] sm:$0xf] %v2660
        %2693 = vst [vmem:[%s251 + $0x24] sm:$0xf] %v2661
        %2694 = vst [vmem:[%s251 + $0x28] sm:$0xf] %v2662
        %2695 = vst [vmem:[%s251 + $0x2c] sm:$0xf] %v2663
        %2696 = vst [vmem:[%s251 + $0x30] sm:$0xf] %v2664
        %2697 = vst [vmem:[%s251 + $0x34] sm:$0xf] %v2665
        %2698 = vst [vmem:[%s251 + $0x38] sm:$0xf] %v2666
        %2699 = vst [vmem:[%s251 + $0x3c] sm:$0xf] %v2667
        %2700 = vst [vmem:[%s251 + $0x40] sm:$0xf] %v2668
        %2701 = vst [vmem:[%s251 + $0x44] sm:$0xf] %v2669
        %2702 = vst [vmem:[%s251 + $0x48] sm:$0xf] %v2670
        %2703 = vst [vmem:[%s251 + $0x4c] sm:$0xf] %v2671
        %2704 = vst [vmem:[%s251 + $0x50] sm:$0xf] %v2672
        %2705 = vst [vmem:[%s251 + $0x54] sm:$0xf] %v2673
        %2706 = vst [vmem:[%s251 + $0x58] sm:$0xf] %v2674
        %2707 = vst [vmem:[%s251 + $0x5c] sm:$0xf] %v2675
        %2708 = vst [vmem:[%s251 + $0x60] sm:$0xf] %v2676
        %2709 = vst [vmem:[%s251 + $0x64] sm:$0xf] %v2677
        %2710 = vst [vmem:[%s251 + $0x68] sm:$0xf] %v2678
        %2711 = vst [vmem:[%s251 + $0x6c] sm:$0xf] %v2679
        %2712 = vst [vmem:[%s251 + $0x70] sm:$0xf] %v2680
        %2713 = vst [vmem:[%s251 + $0x74] sm:$0xf] %v2681
        %2714 = vst [vmem:[%s251 + $0x78] sm:$0xf] %v2682
        %2715 = vst [vmem:[%s251 + $0x7c] sm:$0xf] %v2683
        %v2716 = vld [vmem:[%s2] sm:$0xf]
        %v2717 = vld [vmem:[%s2 + $0x4] sm:$0xf]
        %v2718 = vld [vmem:[%s2 + $0x8] sm:$0xf]
        %v2719 = vld [vmem:[%s2 + $0xc] sm:$0xf]
        %v2720 = vld [vmem:[%s2 + $0x10] sm:$0xf]
        %v2721 = vld [vmem:[%s2 + $0x14] sm:$0xf]
        %v2722 = vld [vmem:[%s2 + $0x18] sm:$0xf]
        %v2723 = vld [vmem:[%s2 + $0x1c] sm:$0xf]
        %v2724 = vld [vmem:[%s2 + $0x20] sm:$0xf]
        %v2725 = vld [vmem:[%s2 + $0x24] sm:$0xf]
        %v2726 = vld [vmem:[%s2 + $0x28] sm:$0xf]
        %v2727 = vld [vmem:[%s2 + $0x2c] sm:$0xf]
        %v2728 = vld [vmem:[%s2 + $0x30] sm:$0xf]
        %v2729 = vld [vmem:[%s2 + $0x34] sm:$0xf]
        %v2730 = vld [vmem:[%s2 + $0x38] sm:$0xf]
        %v2731 = vld [vmem:[%s2 + $0x3c] sm:$0xf]
        %v2748 = vunpack.c.l.b16 %v2716
        %v2749 = vunpack.c.l.b16 %v2717
        %v2750 = vunpack.c.l.b16 %v2718
        %v2751 = vunpack.c.l.b16 %v2719
        %v2752 = vunpack.c.l.b16 %v2720
        %v2753 = vunpack.c.l.b16 %v2721
        %v2754 = vunpack.c.l.b16 %v2722
        %v2755 = vunpack.c.l.b16 %v2723
        %v2756 = vunpack.c.l.b16 %v2724
        %v2757 = vunpack.c.l.b16 %v2725
        %v2758 = vunpack.c.l.b16 %v2726
        %v2759 = vunpack.c.l.b16 %v2727
        %v2760 = vunpack.c.l.b16 %v2728
        %v2761 = vunpack.c.l.b16 %v2729
        %v2762 = vunpack.c.l.b16 %v2730
        %v2763 = vunpack.c.l.b16 %v2731
        %v2764 = vpack.c.b16 %v2749, %v2748
        %v2765 = vpack.c.b16 %v2751, %v2750
        %v2766 = vpack.c.b16 %v2753, %v2752
        %v2767 = vpack.c.b16 %v2755, %v2754
        %v2768 = vpack.c.b16 %v2757, %v2756
        %v2769 = vpack.c.b16 %v2759, %v2758
        %v2770 = vpack.c.b16 %v2761, %v2760
        %v2771 = vpack.c.b16 %v2763, %v2762
        %2780 = vmatpush.bf16.msra.mxu0 %v2771
        %2781 = vmatpush.bf16.msra.mxu0 %v2770
        %2782 = vmatpush.bf16.msra.mxu0 %v2769
        %2783 = vmatpush.bf16.msra.mxu0 %v2768
        %2784 = vmatpush.bf16.msra.mxu0 %v2767
        %2785 = vmatpush.bf16.msra.mxu0 %v2766
        %2786 = vmatpush.bf16.msra.mxu0 %v2765
        %2787 = vmatpush.bf16.msra.mxu0 %v2764
        %2788 = vmatmul.bf16.gmra.mxu0 %v1047
        %v2789 = vpop.f32.mrf.mxu0
        %v2790 = vadd.f32 0.0, %v2789
        %v2791 = vpop.f32.mrf.mxu0
        %v2792 = vadd.f32 0.0, %v2791
        %2793 = vmatmul.bf16.gmra.mxu0 %v1048
        %v2794 = vpop.f32.mrf.mxu0
        %v2795 = vadd.f32 0.0, %v2794
        %v2796 = vpop.f32.mrf.mxu0
        %v2797 = vadd.f32 0.0, %v2796
        %2798 = vmatmul.bf16.gmra.mxu0 %v1049
        %v2799 = vpop.f32.mrf.mxu0
        %v2800 = vadd.f32 0.0, %v2799
        %v2801 = vpop.f32.mrf.mxu0
        %v2802 = vadd.f32 0.0, %v2801
        %2803 = vmatmul.bf16.gmra.mxu0 %v1050
        %v2804 = vpop.f32.mrf.mxu0
        %v2805 = vadd.f32 0.0, %v2804
        %v2806 = vpop.f32.mrf.mxu0
        %v2807 = vadd.f32 0.0, %v2806
        %2808 = vmatmul.bf16.gmra.mxu0 %v1051
        %v2809 = vpop.f32.mrf.mxu0
        %v2810 = vadd.f32 0.0, %v2809
        %v2811 = vpop.f32.mrf.mxu0
        %v2812 = vadd.f32 0.0, %v2811
        %2813 = vmatmul.bf16.gmra.mxu0 %v1052
        %v2814 = vpop.f32.mrf.mxu0
        %v2815 = vadd.f32 0.0, %v2814
        %v2816 = vpop.f32.mrf.mxu0
        %v2817 = vadd.f32 0.0, %v2816
        %2818 = vmatmul.bf16.gmra.mxu0 %v1053
        %v2819 = vpop.f32.mrf.mxu0
        %v2820 = vadd.f32 0.0, %v2819
        %v2821 = vpop.f32.mrf.mxu0
        %v2822 = vadd.f32 0.0, %v2821
        %2823 = vmatmul.bf16.gmra.mxu0 %v1054
        %v2824 = vpop.f32.mrf.mxu0
        %v2825 = vadd.f32 0.0, %v2824
        %v2826 = vpop.f32.mrf.mxu0
        %v2827 = vadd.f32 0.0, %v2826
        %2828 = vmatmul.bf16.gmra.mxu0 %v1055
        %v2829 = vpop.f32.mrf.mxu0
        %v2830 = vadd.f32 0.0, %v2829
        %v2831 = vpop.f32.mrf.mxu0
        %v2832 = vadd.f32 0.0, %v2831
        %2833 = vmatmul.bf16.gmra.mxu0 %v1056
        %v2834 = vpop.f32.mrf.mxu0
        %v2835 = vadd.f32 0.0, %v2834
        %v2836 = vpop.f32.mrf.mxu0
        %v2837 = vadd.f32 0.0, %v2836
        %2838 = vmatmul.bf16.gmra.mxu0 %v1057
        %v2839 = vpop.f32.mrf.mxu0
        %v2840 = vadd.f32 0.0, %v2839
        %v2841 = vpop.f32.mrf.mxu0
        %v2842 = vadd.f32 0.0, %v2841
        %2843 = vmatmul.bf16.gmra.mxu0 %v1058
        %v2844 = vpop.f32.mrf.mxu0
        %v2845 = vadd.f32 0.0, %v2844
        %v2846 = vpop.f32.mrf.mxu0
        %v2847 = vadd.f32 0.0, %v2846
        %2848 = vmatmul.bf16.gmra.mxu0 %v1059
        %v2849 = vpop.f32.mrf.mxu0
        %v2850 = vadd.f32 0.0, %v2849
        %v2851 = vpop.f32.mrf.mxu0
        %v2852 = vadd.f32 0.0, %v2851
        %2853 = vmatmul.bf16.gmra.mxu0 %v1060
        %v2854 = vpop.f32.mrf.mxu0
        %v2855 = vadd.f32 0.0, %v2854
        %v2856 = vpop.f32.mrf.mxu0
        %v2857 = vadd.f32 0.0, %v2856
        %2858 = vmatmul.bf16.gmra.mxu0 %v1061
        %v2859 = vpop.f32.mrf.mxu0
        %v2860 = vadd.f32 0.0, %v2859
        %v2861 = vpop.f32.mrf.mxu0
        %v2862 = vadd.f32 0.0, %v2861
        %2863 = vmatmul.bf16.gmra.mxu0 %v1148
        %v2864 = vpop.f32.mrf.mxu0
        %v2865 = vadd.f32 0.0, %v2864
        %v2866 = vpop.f32.mrf.mxu0
        %v2867 = vadd.f32 0.0, %v2866
        %2868 = vdwg.mxu0
        %v2869 = vadd.f32 %v2790, %v2792
        %v2870 = vadd.f32 %v2869, %v2795
        %v2871 = vadd.f32 %v2870, %v2797
        %v2872 = vadd.f32 %v2871, %v2800
        %v2873 = vadd.f32 %v2872, %v2802
        %v2874 = vadd.f32 %v2873, %v2805
        %v2875 = vadd.f32 %v2874, %v2807
        %v2876 = vadd.f32 %v2875, %v2810
        %v2877 = vadd.f32 %v2876, %v2812
        %v2878 = vadd.f32 %v2877, %v2815
        %v2879 = vadd.f32 %v2878, %v2817
        %v2880 = vadd.f32 %v2879, %v2820
        %v2881 = vadd.f32 %v2880, %v2822
        %v2882 = vadd.f32 %v2881, %v2825
        %v2883 = vadd.f32 %v2882, %v2827
        %v2884 = vadd.f32 %v2883, %v2830
        %v2885 = vadd.f32 %v2884, %v2832
        %v2886 = vadd.f32 %v2885, %v2835
        %v2887 = vadd.f32 %v2886, %v2837
        %v2888 = vadd.f32 %v2887, %v2840
        %v2889 = vadd.f32 %v2888, %v2842
        %v2890 = vadd.f32 %v2889, %v2845
        %v2891 = vadd.f32 %v2890, %v2847
        %v2892 = vadd.f32 %v2891, %v2850
        %v2893 = vadd.f32 %v2892, %v2852
        %v2894 = vadd.f32 %v2893, %v2855
        %v2895 = vadd.f32 %v2894, %v2857
        %v2896 = vadd.f32 %v2895, %v2860
        %v2897 = vadd.f32 %v2896, %v2862
        %v2898 = vadd.f32 %v2897, %v2865
        %v2899 = vadd.f32 %v2898, %v2867
        %v2900 = vrot.slane %v2899, 4
        %v2901 = vadd.f32 %v2899, %v2900
        %v2902 = vrot.slane %v2901, 2
        %v2903 = vadd.f32 %v2901, %v2902
        %v2904 = vrot.slane %v2903, 1
        %v2905 = vadd.f32 %v2903, %v2904
        %v2906 = vmul.f32 %v2790, %v2790
        %v2907 = vmul.f32 %v2792, %v2792
        %v2908 = vmul.f32 %v2795, %v2795
        %v2909 = vmul.f32 %v2797, %v2797
        %v2910 = vmul.f32 %v2800, %v2800
        %v2911 = vmul.f32 %v2802, %v2802
        %v2912 = vmul.f32 %v2805, %v2805
        %v2913 = vmul.f32 %v2807, %v2807
        %v2914 = vmul.f32 %v2810, %v2810
        %v2915 = vmul.f32 %v2812, %v2812
        %v2916 = vmul.f32 %v2815, %v2815
        %v2917 = vmul.f32 %v2817, %v2817
        %v2918 = vmul.f32 %v2820, %v2820
        %v2919 = vmul.f32 %v2822, %v2822
        %v2920 = vmul.f32 %v2825, %v2825
        %v2921 = vmul.f32 %v2827, %v2827
        %v2922 = vmul.f32 %v2830, %v2830
        %v2923 = vmul.f32 %v2832, %v2832
        %v2924 = vmul.f32 %v2835, %v2835
        %v2925 = vmul.f32 %v2837, %v2837
        %v2926 = vmul.f32 %v2840, %v2840
        %v2927 = vmul.f32 %v2842, %v2842
        %v2928 = vmul.f32 %v2845, %v2845
        %v2929 = vmul.f32 %v2847, %v2847
        %v2930 = vmul.f32 %v2850, %v2850
        %v2931 = vmul.f32 %v2852, %v2852
        %v2932 = vmul.f32 %v2855, %v2855
        %v2933 = vmul.f32 %v2857, %v2857
        %v2934 = vmul.f32 %v2860, %v2860
        %v2935 = vmul.f32 %v2862, %v2862
        %v2936 = vmul.f32 %v2865, %v2865
        %v2937 = vmul.f32 %v2867, %v2867
        %v2938 = vadd.f32 %v2906, %v2907
        %v2939 = vadd.f32 %v2938, %v2908
        %v2940 = vadd.f32 %v2939, %v2909
        %v2941 = vadd.f32 %v2940, %v2910
        %v2942 = vadd.f32 %v2941, %v2911
        %v2943 = vadd.f32 %v2942, %v2912
        %v2944 = vadd.f32 %v2943, %v2913
        %v2945 = vadd.f32 %v2944, %v2914
        %v2946 = vadd.f32 %v2945, %v2915
        %v2947 = vadd.f32 %v2946, %v2916
        %v2948 = vadd.f32 %v2947, %v2917
        %v2949 = vadd.f32 %v2948, %v2918
        %v2950 = vadd.f32 %v2949, %v2919
        %v2951 = vadd.f32 %v2950, %v2920
        %v2952 = vadd.f32 %v2951, %v2921
        %v2953 = vadd.f32 %v2952, %v2922
        %v2954 = vadd.f32 %v2953, %v2923
        %v2955 = vadd.f32 %v2954, %v2924
        %v2956 = vadd.f32 %v2955, %v2925
        %v2957 = vadd.f32 %v2956, %v2926
        %v2958 = vadd.f32 %v2957, %v2927
        %v2959 = vadd.f32 %v2958, %v2928
        %v2960 = vadd.f32 %v2959, %v2929
        %v2961 = vadd.f32 %v2960, %v2930
        %v2962 = vadd.f32 %v2961, %v2931
        %v2963 = vadd.f32 %v2962, %v2932
        %v2964 = vadd.f32 %v2963, %v2933
        %v2965 = vadd.f32 %v2964, %v2934
        %v2966 = vadd.f32 %v2965, %v2935
        %v2967 = vadd.f32 %v2966, %v2936
        %v2968 = vadd.f32 %v2967, %v2937
        %v2969 = vrot.slane %v2968, 4
        %v2970 = vadd.f32 %v2968, %v2969
        %v2971 = vrot.slane %v2970, 2
        %v2972 = vadd.f32 %v2970, %v2971
        %v2973 = vrot.slane %v2972, 1
        %v2974 = vadd.f32 %v2972, %v2973
        %v2975 = vsel %vm2649, %v2905, %v2974
        %2976 = vst [vmem:[%s272] sm:$0x3] %v2975
        %v2977 = vpack.c.bf16 %v2790, %v2790
        %v2978 = vpack.c.bf16 %v2792, %v2792
        %v2979 = vpack.c.bf16 %v2795, %v2795
        %v2980 = vpack.c.bf16 %v2797, %v2797
        %v2981 = vpack.c.bf16 %v2800, %v2800
        %v2982 = vpack.c.bf16 %v2802, %v2802
        %v2983 = vpack.c.bf16 %v2805, %v2805
        %v2984 = vpack.c.bf16 %v2807, %v2807
        %v2985 = vpack.c.bf16 %v2810, %v2810
        %v2986 = vpack.c.bf16 %v2812, %v2812
        %v2987 = vpack.c.bf16 %v2815, %v2815
        %v2988 = vpack.c.bf16 %v2817, %v2817
        %v2989 = vpack.c.bf16 %v2820, %v2820
        %v2990 = vpack.c.bf16 %v2822, %v2822
        %v2991 = vpack.c.bf16 %v2825, %v2825
        %v2992 = vpack.c.bf16 %v2827, %v2827
        %v2993 = vpack.c.bf16 %v2830, %v2830
        %v2994 = vpack.c.bf16 %v2832, %v2832
        %v2995 = vpack.c.bf16 %v2835, %v2835
        %v2996 = vpack.c.bf16 %v2837, %v2837
        %v2997 = vpack.c.bf16 %v2840, %v2840
        %v2998 = vpack.c.bf16 %v2842, %v2842
        %v2999 = vpack.c.bf16 %v2845, %v2845
        %v3000 = vpack.c.bf16 %v2847, %v2847
        %v3001 = vpack.c.bf16 %v2850, %v2850
        %v3002 = vpack.c.bf16 %v2852, %v2852
        %v3003 = vpack.c.bf16 %v2855, %v2855
        %v3004 = vpack.c.bf16 %v2857, %v2857
        %v3005 = vpack.c.bf16 %v2860, %v2860
        %v3006 = vpack.c.bf16 %v2862, %v2862
        %v3007 = vpack.c.bf16 %v2865, %v2865
        %v3008 = vpack.c.bf16 %v2867, %v2867
        %3009 = vst [vmem:[%s258] sm:$0xf] %v2977
        %3010 = vst [vmem:[%s258 + $0x4] sm:$0xf] %v2978
        %3011 = vst [vmem:[%s258 + $0x8] sm:$0xf] %v2979
        %3012 = vst [vmem:[%s258 + $0xc] sm:$0xf] %v2980
        %3013 = vst [vmem:[%s258 + $0x10] sm:$0xf] %v2981
        %3014 = vst [vmem:[%s258 + $0x14] sm:$0xf] %v2982
        %3015 = vst [vmem:[%s258 + $0x18] sm:$0xf] %v2983
        %3016 = vst [vmem:[%s258 + $0x1c] sm:$0xf] %v2984
        %3017 = vst [vmem:[%s258 + $0x20] sm:$0xf] %v2985
        %3018 = vst [vmem:[%s258 + $0x24] sm:$0xf] %v2986
        %3019 = vst [vmem:[%s258 + $0x28] sm:$0xf] %v2987
        %3020 = vst [vmem:[%s258 + $0x2c] sm:$0xf] %v2988
        %3021 = vst [vmem:[%s258 + $0x30] sm:$0xf] %v2989
        %3022 = vst [vmem:[%s258 + $0x34] sm:$0xf] %v2990
        %3023 = vst [vmem:[%s258 + $0x38] sm:$0xf] %v2991
        %3024 = vst [vmem:[%s258 + $0x3c] sm:$0xf] %v2992
        %3025 = vst [vmem:[%s258 + $0x40] sm:$0xf] %v2993
        %3026 = vst [vmem:[%s258 + $0x44] sm:$0xf] %v2994
        %3027 = vst [vmem:[%s258 + $0x48] sm:$0xf] %v2995
        %3028 = vst [vmem:[%s258 + $0x4c] sm:$0xf] %v2996
        %3029 = vst [vmem:[%s258 + $0x50] sm:$0xf] %v2997
        %3030 = vst [vmem:[%s258 + $0x54] sm:$0xf] %v2998
        %3031 = vst [vmem:[%s258 + $0x58] sm:$0xf] %v2999
        %3032 = vst [vmem:[%s258 + $0x5c] sm:$0xf] %v3000
        %3033 = vst [vmem:[%s258 + $0x60] sm:$0xf] %v3001
        %3034 = vst [vmem:[%s258 + $0x64] sm:$0xf] %v3002
        %3035 = vst [vmem:[%s258 + $0x68] sm:$0xf] %v3003
        %3036 = vst [vmem:[%s258 + $0x6c] sm:$0xf] %v3004
        %3037 = vst [vmem:[%s258 + $0x70] sm:$0xf] %v3005
        %3038 = vst [vmem:[%s258 + $0x74] sm:$0xf] %v3006
        %3039 = vst [vmem:[%s258 + $0x78] sm:$0xf] %v3007
        %3040 = vst [vmem:[%s258 + $0x7c] sm:$0xf] %v3008
        %s3041 = sand.u32 %s103, 1
        %s3042 = scalar_lea.sflag [#allocation3], %s3041
        %s3043 = sand.u32 %s103, 1
        %s3044 = smul.addr %s3043, 128
        %s3045 = scalar_lea.vmem [#allocation2], %s3044
        %s3046 = sand.u32 %s27, 1
        %s3047 = scalar_lea.sflag [#allocation5], %s3046
        %s3048 = sand.u32 %s129, 1
        %s3049 = smul.addr %s3048, 128
        %s3050 = scalar_lea.vmem [#allocation4], %s3049
        %s3051 = sand.u32 %s27, 1
        %s3052 = scalar_lea.sflag [#allocation5], %s3051
        %s3053 = sand.u32 %s155, 1
        %s3054 = smul.addr %s3053, 2
        %s3055 = scalar_lea.vmem [#allocation6], %s3054
        %s3056 = sand.u32 %s181, 1
        %s3057 = scalar_lea.sflag [#allocation8], %s3056
        %s3058 = sand.u32 %s181, 1
        %s3059 = smul.addr %s3058, 2
        %s3060 = scalar_lea.vmem [#allocation7], %s3059
        // Predicated region
        $region33: #{tpu_custom_call.1} parent=31 // pred_check
          %p3061 = pneg %p113
        $region34: #{tpu_custom_call.1} parent=31 // pred_check_branch
          %3063 = sbr.rel (%p3061) target = $region36
        $region35: #{tpu_custom_call.1} parent=31 // pred_region
          %3065 = vsyncadd %s3042, 0
          %s3066 = smul.addr %s27, 32
          %s3067 = smul.addr %s3066, 4
          %s3068 = scalar_lea.hbm %s3, %s3067
          %s3069 = sshll.u32 %s3045, 4
          %s3070 = int_to_ptr.vmem [resolvable:$true] %s3069
          %s3071 = sshll.u32 %s3068, 4
          %s3072 = int_to_ptr.hbm [resolvable:$true] %s3071
          %3077 = dma.vmem_to_hbm [thread:$0]  %s3070, 2048, %s3072, %s3042, 64, 64, 4
        $region36: #{tpu_custom_call.1} parent=31 // pred_fallthru
          _
        // Predicated region
        $region37: #{tpu_custom_call.1} parent=31 // pred_check
          %p3078 = pneg %p139
        $region38: #{tpu_custom_call.1} parent=31 // pred_check_branch
          %3080 = sbr.rel (%p3078) target = $region40
        $region39: #{tpu_custom_call.1} parent=31 // pred_region
          %3082 = vsyncadd %s3047, 0
          %s3083 = smul.addr %s27, 32
          %s3084 = smul.addr %s3083, 4
          %s3085 = scalar_lea.hbm %s4, %s3084
          %s3086 = sshll.u32 %s3050, 4
          %s3087 = int_to_ptr.vmem [resolvable:$true] %s3086
          %s3088 = sshll.u32 %s3085, 4
          %s3089 = int_to_ptr.hbm [resolvable:$true] %s3088
          %3094 = dma.vmem_to_hbm [thread:$0]  %s3087, 2048, %s3089, %s3047, 64, 64, 4
        $region40: #{tpu_custom_call.1} parent=31 // pred_fallthru
          _
        // Predicated region
        $region41: #{tpu_custom_call.1} parent=31 // pred_check
          %p3095 = pneg %p165
        $region42: #{tpu_custom_call.1} parent=31 // pred_check_branch
          %3097 = sbr.rel (%p3095) target = $region44
        $region43: #{tpu_custom_call.1} parent=31 // pred_region
          %3099 = vsyncadd %s3052, 0
          %s3100 = smul.addr %s27, 2
          %s3101 = scalar_lea.hbm %s5, %s3100
          %s3103 = sshll.u32 %s3055, 4
          %s3104 = int_to_ptr.vmem [resolvable:$true] %s3103
          %s3105 = sshll.u32 %s3101, 4
          %s3106 = int_to_ptr.hbm [resolvable:$true] %s3105
          %3108 = dma.vmem_to_hbm [thread:$0]  %s3104, 32, %s3106, %s3052
        $region44: #{tpu_custom_call.1} parent=31 // pred_fallthru
          _
        // Predicated region
        $region45: #{tpu_custom_call.1} parent=31 // pred_check
          %p3109 = pneg %p191
        $region46: #{tpu_custom_call.1} parent=31 // pred_check_branch
          %3111 = sbr.rel (%p3109) target = $region48
        $region47: #{tpu_custom_call.1} parent=31 // pred_region
          %3113 = vsyncadd %s3057, 0
          %s3114 = smul.addr %s27, 2
          %s3115 = scalar_lea.hbm %s6, %s3114
          %s3117 = sshll.u32 %s3060, 4
          %s3118 = int_to_ptr.vmem [resolvable:$true] %s3117
          %s3119 = sshll.u32 %s3115, 4
          %s3120 = int_to_ptr.hbm [resolvable:$true] %s3119
          %3122 = dma.vmem_to_hbm [thread:$0]  %s3118, 32, %s3120, %s3057
        $region48: #{tpu_custom_call.1} parent=31 // pred_fallthru
          _
      $region32: #{tpu_custom_call.1} parent=5 // pred_fallthru
        _
      %p3123 = scmp.le.s32.totalorder 2, %s22
      // Predicated region
      $region49: #{tpu_custom_call.1} parent=5 // pred_check
        %p3124 = pneg %p3123
      $region50: #{tpu_custom_call.1} parent=5 // pred_check_branch
        %3126 = sbr.rel (%p3124) target = $region52
      $region51: #{tpu_custom_call.1} parent=5 // pred_region
        %s3127 = ssub.s32 %s22, 2
        // Predicated region
        $region53: #{tpu_custom_call.1} parent=51 // pred_check
          %p3128 = pneg %p119
        $region54: #{tpu_custom_call.1} parent=51 // pred_check_branch
          %3130 = sbr.rel (%p3128) target = $region56
        $region55: #{tpu_custom_call.1} parent=51 // pred_region
          %s3131 = sand.u32 %s104, 1
          %s3132 = scalar_lea.sflag [#allocation3], %s3131
          %s3133 = sand.u32 %s104, 1
          %s3134 = smul.addr %s3133, 128
          %s3135 = scalar_lea.vmem [#allocation2], %s3134
          %3137 = dma.done %s3132, 2048
        $region56: #{tpu_custom_call.1} parent=51 // pred_fallthru
          _
        // Predicated region
        $region57: #{tpu_custom_call.1} parent=51 // pred_check
          %p3138 = pneg %p145
        $region58: #{tpu_custom_call.1} parent=51 // pred_check_branch
          %3140 = sbr.rel (%p3138) target = $region60
        $region59: #{tpu_custom_call.1} parent=51 // pred_region
          %s3141 = sand.u32 %s28, 1
          %s3142 = scalar_lea.sflag [#allocation5], %s3141
          %s3143 = sand.u32 %s130, 1
          %s3144 = smul.addr %s3143, 128
          %s3145 = scalar_lea.vmem [#allocation4], %s3144
          %3147 = dma.done %s3142, 2048
        $region60: #{tpu_custom_call.1} parent=51 // pred_fallthru
          _
        // Predicated region
        $region61: #{tpu_custom_call.1} parent=51 // pred_check
          %p3148 = pneg %p171
        $region62: #{tpu_custom_call.1} parent=51 // pred_check_branch
          %3150 = sbr.rel (%p3148) target = $region64
        $region63: #{tpu_custom_call.1} parent=51 // pred_region
          %s3151 = sand.u32 %s28, 1
          %s3152 = scalar_lea.sflag [#allocation5], %s3151
          %s3153 = sand.u32 %s156, 1
          %s3154 = smul.addr %s3153, 2
          %s3155 = scalar_lea.vmem [#allocation6], %s3154
          %3157 = dma.done %s3152, 32
        $region64: #{tpu_custom_call.1} parent=51 // pred_fallthru
          _
        // Predicated region
        $region65: #{tpu_custom_call.1} parent=51 // pred_check
          %p3158 = pneg %p197
        $region66: #{tpu_custom_call.1} parent=51 // pred_check_branch
          %3160 = sbr.rel (%p3158) target = $region68
        $region67: #{tpu_custom_call.1} parent=51 // pred_region
          %s3161 = sand.u32 %s182, 1
          %s3162 = scalar_lea.sflag [#allocation8], %s3161
          %s3163 = sand.u32 %s182, 1
          %s3164 = smul.addr %s3163, 2
          %s3165 = scalar_lea.vmem [#allocation7], %s3164
          %3167 = dma.done %s3162, 32
        $region68: #{tpu_custom_call.1} parent=51 // pred_fallthru
          _
      $region52: #{tpu_custom_call.1} parent=5 // pred_fallthru
        _
    $region6: #{tpu_custom_call.1} parent=1 // loop_footer
      %s26 = sadd.s32 1, %s22
    $region7: #{tpu_custom_call.1} parent=1 // loop_footer_branch
      %21 = sbr.rel target = $region3
    $region8: #{tpu_custom_call.1} parent=1 // loop_exit
      _
    %3168 = vsyncpa [#allocation3], 1
    %s3169 = scalar_lea.sflag [#allocation3], 1
    %3170 = vsyncpa %s3169, 1
    %3171 = vsyncpa [#allocation5], 1
    %s3172 = scalar_lea.sflag [#allocation5], 1
    %3173 = vsyncpa %s3172, 1
    %3174 = vsyncpa [#allocation8], 1
    %s3175 = scalar_lea.sflag [#allocation8], 1
    %3176 = vsyncpa %s3175, 1

</llo_original>
